<compile_context>
chip_gen: v7x
topology: tpu7x:2x2x1
jax: 0.10.0
libtpu: 0.0.40
codegen_flags: <defaults>
</compile_context>

<pallas_src>
import numpy as np
import jax
import jax.numpy as jnp
from jax import lax
from jax.experimental import pallas as pl
from jax.experimental.pallas import tpu as pltpu

EPS = 1e-5  # nn.GroupNorm default eps


def _round_up(x, m):
    return (x + m - 1) // m * m


def _pick_block_n(n, hw, target_lanes=1024):
    # Samples per grid step: widen the matmul N (lane) dimension to about
    # `target_lanes` to amortize per-step pipeline overhead, but keep >= 2
    # grid steps when the batch allows it so v7x can shard across both TCs.
    divisors = [d for d in range(1, n + 1) if n % d == 0]
    best = 1
    for d in divisors:
        if d * hw <= max(target_lanes, hw):
            best = d
    if n // best == 1 and n >= 2:
        smaller = [d for d in divisors if d < best and n // d >= 2]
        if smaller:
            best = max(smaller)
    return best


def _border_masks(h, w):
    # (9, 1, HW) f32 0/1 masks: tap (dy, dx) at destination pixel (y, x) is
    # valid iff the source pixel (y+dy, x+dx) lies inside the image.  These
    # masks also kill every value the lane rotation wraps in (cross-row,
    # cross-sample and end-of-slab wrap), so pltpu.roll is safe to use.
    hw = h * w
    yy, xx = np.meshgrid(np.arange(h), np.arange(w), indexing="ij")
    rows = []
    for dy in (-1, 0, 1):
        for dx in (-1, 0, 1):
            valid = ((yy + dy >= 0) & (yy + dy < h) &
                     (xx + dx >= 0) & (xx + dx < w))
            rows.append(valid.reshape(1, hw))
    return jnp.asarray(np.stack(rows, axis=0), dtype=jnp.float32)


def _pack_conv_weight(wt, cin, cout, cpad):
    # wt: (9, cin, cout) -> (cpad, 9*cpad) bf16 with [o, t*cpad + c] = wt[t,c,o].
    # Padded in/out channels get zero weights (mathematically inert); weights
    # are pre-cast to bf16 so no per-grid-step cast runs inside the kernel.
    wz = jnp.zeros((9, cpad, cpad), jnp.float32)
    wz = wz.at[:, :cin, :cout].set(wt.astype(jnp.float32))
    return wz.transpose(2, 0, 1).reshape(cpad, 9 * cpad).astype(jnp.bfloat16)


def _pad_vec(v, cpad):
    return jnp.pad(v.astype(jnp.float32), (0, cpad - v.shape[0])).reshape(cpad, 1)


def _make_kernel(img_w, hw, bn, cpad, cin, cout, identity_skip):
    inv_n1 = 1.0 / float(cin * hw)    # real (unpadded) GroupNorm counts
    inv_n2 = 1.0 / float(cout * hw)

    def gn_relu(xb, g, b, inv_count):
        # GroupNorm(1, C) + ReLU on one sample slab (cpad, hw).  Padded rows
        # are zero and have gamma = beta = 0, so they stay exactly zero.  Sum
        # and sum-of-squares come from one stacked reduction pass; the affine
        # is folded into a single scale/offset FMA.
        stacked = jnp.concatenate([xb, xb * xb], axis=0)       # (2*cpad, hw)
        persum = jnp.sum(stacked, axis=1, keepdims=True)       # (2*cpad, 1)
        s1 = jnp.sum(persum[:cpad])
        s2 = jnp.sum(persum[cpad:])
        mean = s1 * inv_count
        # TODO(synk): one-pass variance (E[x^2]-mean^2) can lose precision when
        # |mean| >> std; switch to two-pass if tighter GroupNorm parity is needed.
        var = s2 * inv_count - mean * mean
        rstd = lax.rsqrt(var + EPS)
        scale = g * rstd
        offset = b - mean * scale
        return jnp.maximum(xb * scale + offset, 0.0)

    def write_taps(hb, b, masks, patch_ref):
        # hb: (cpad, hw) f32 post-GN/ReLU activations of sample b.  Each tap:
        # XLU lane rotation + fused mask-mul + bf16 cast, stored at a
        # (16,128)-aligned offset of the shared im2col scratch.
        col = b * hw
        t = 0
        for dy in (-1, 0, 1):
            for dx in (-1, 0, 1):
                s = dy * img_w + dx
                if s == 0:
                    tap = hb
                else:
                    rolled = pltpu.roll(hb, shift=(-s) % hw, axis=1)  # out[p] = hb[p+s]
                    tap = rolled * masks[t]        # zero wrapped / out-of-image taps
                patch_ref[t * cpad:(t + 1) * cpad, col:col + hw] = (
                    tap.astype(jnp.bfloat16))
                t += 1

    def kernel(mask_ref, x_ref, g1_ref, b1_ref, w1_ref, g2_ref, b2_ref,
               w2_ref, *rest):
        if identity_skip:
            o_ref, patch_ref = rest
            wskip_ref = None
        else:
            wskip_ref, o_ref, patch_ref = rest

        masks = mask_ref[...]                           # (9, 1, hw), loaded once

        # conv1: per-sample GN+ReLU + im2col taps, then ONE fused MXU matmul.
        g1 = g1_ref[...]
        b1 = b1_ref[...]
        for b in range(bn):
            h1 = gn_relu(x_ref[b], g1, b1, inv_n1)
            write_taps(h1, b, masks, patch_ref)
        c1 = jnp.dot(w1_ref[...], patch_ref[...],
                     preferred_element_type=jnp.float32)     # (cpad, bn*hw)

        # conv2 reuses the same scratch (c1 is fully computed before rewrite).
        g2 = g2_ref[...]
        b2 = b2_ref[...]
        for b in range(bn):
            h2 = gn_relu(c1[:, b * hw:(b + 1) * hw], g2, b2, inv_n2)
            write_taps(h2, b, masks, patch_ref)
        c2 = jnp.dot(w2_ref[...], patch_ref[...],
                     preferred_element_type=jnp.float32)     # (cpad, bn*hw)

        # skip + residual add (identity specialized at trace time).
        for b in range(bn):
            if identity_skip:
                skip = x_ref[b]                              # nn.Identity
            else:
                skip = jnp.dot(wskip_ref[...], x_ref[b].astype(jnp.bfloat16),
                               preferred_element_type=jnp.float32)  # 1x1 conv
            o_ref[b] = (skip + c2[:, b * hw:(b + 1) * hw]).astype(o_ref.dtype)

    return kernel


def resnet_v2_block_ln(x_nchw, params, *, target_lanes=1024):
    """Forward pass of ResNetV2BlockLN. x_nchw: (N, Cin, H, W) float32."""
    x = x_nchw.astype(jnp.float32)
    n, cin, h, w = x.shape
    cout = params["w2"].shape[-1]
    hw = h * w
    identity_skip = (cin == cout)

    # One common padded channel count (multiple of 16 -> aligned bf16 stores).
    cpad = _round_up(max(cin, cout), 16)
    bn = _pick_block_n(n, hw, target_lanes)

    x2 = jnp.pad(x.reshape(n, cin, hw), ((0, 0), (0, cpad - cin), (0, 0)))
    mask = _border_masks(h, w)

    w1m = _pack_conv_weight(params["w1"], cin, cout, cpad)   # bf16 (cpad, 9*cpad)
    w2m = _pack_conv_weight(params["w2"], cout, cout, cpad)  # bf16 (cpad, 9*cpad)
    g1 = _pad_vec(params["g1"], cpad)
    b1 = _pad_vec(params["b1"], cpad)
    g2 = _pad_vec(params["g2"], cpad)
    b2 = _pad_vec(params["b2"], cpad)

    in_specs = [
        pl.BlockSpec((9, 1, hw), lambda i: (0, 0, 0)),        # border masks
        pl.BlockSpec((bn, cpad, hw), lambda i: (i, 0, 0)),    # x (bn samples)
        pl.BlockSpec((cpad, 1), lambda i: (0, 0)),            # gn1 weight
        pl.BlockSpec((cpad, 1), lambda i: (0, 0)),            # gn1 bias
        pl.BlockSpec((cpad, 9 * cpad), lambda i: (0, 0)),     # conv1 weight (bf16)
        pl.BlockSpec((cpad, 1), lambda i: (0, 0)),            # gn2 weight
        pl.BlockSpec((cpad, 1), lambda i: (0, 0)),            # gn2 bias
        pl.BlockSpec((cpad, 9 * cpad), lambda i: (0, 0)),     # conv2 weight (bf16)
    ]
    args = [mask, x2, g1, b1, w1m, g2, b2, w2m]
    if not identity_skip:
        wskip = (jnp.zeros((cpad, cpad), jnp.float32)
                 .at[:cout, :cin].set(params["wskip"].astype(jnp.float32))
                 .astype(jnp.bfloat16))
        in_specs.append(pl.BlockSpec((cpad, cpad), lambda i: (0, 0)))
        args.append(wskip)

    # TODO(synk): at production ResNet sizes add an HW-tiling grid axis and/or
    # raise vmem_limit_bytes so the shared bf16 im2col scratch stays within
    # v7x's 64 MiB VMEM; unnecessary at these shapes.
    out = pl.pallas_call(
        _make_kernel(w, hw, bn, cpad, cin, cout, identity_skip),
        out_shape=jax.ShapeDtypeStruct((n, cpad, hw), jnp.float32),
        grid_spec=pltpu.PrefetchScalarGridSpec(
            num_scalar_prefetch=0,
            grid=(n // bn,),
            in_specs=in_specs,
            out_specs=pl.BlockSpec((bn, cpad, hw), lambda i: (i, 0, 0)),
            scratch_shapes=[
                # one shared bf16 im2col scratch for BOTH convs
                pltpu.VMEM((9 * cpad, bn * hw), jnp.bfloat16),
            ],
        ),
        compiler_params=pltpu.CompilerParams(
            dimension_semantics=("parallel",)),
    )(*args)

    return out[:, :cout, :].reshape(n, cout, h, w)


def reference_forward(x, params):
    """Plain-JAX reference (mirrors the PyTorch module) for validation."""
    def gn(hh, g, b):
        mean = hh.mean(axis=(1, 2, 3), keepdims=True)
        var = ((hh - mean) ** 2).mean(axis=(1, 2, 3), keepdims=True)
        hn = (hh - mean) / jnp.sqrt(var + EPS)
        return hn * g.reshape(1, -1, 1, 1) + b.reshape(1, -1, 1, 1)

    def conv3(hh, wt):  # wt: (9, Cin, Cout) -> HWIO
        w4 = wt.reshape(3, 3, wt.shape[1], wt.shape[2])
        return lax.conv_general_dilated(
            hh, w4, (1, 1), "SAME",
            dimension_numbers=("NCHW", "HWIO", "NCHW"))

    h = jnp.maximum(gn(x, params["g1"], params["b1"]), 0.0)
    h = conv3(h, params["w1"])
    h = jnp.maximum(gn(h, params["g2"], params["b2"]), 0.0)
    h = conv3(h, params["w2"])
    if "wskip" in params:
        ws = params["wskip"]  # (Cout, Cin)
        w11 = ws.T.reshape(1, 1, ws.shape[1], ws.shape[0])
        skip = lax.conv_general_dilated(
            x, w11, (1, 1), "SAME",
            dimension_numbers=("NCHW", "HWIO", "NCHW"))
    else:
        skip = x
    return skip + h


def make_params(key, in_maps, out_maps):
    k1, k2, k3, k4, k5, k6, k7 = jax.random.split(key, 7)
    p = dict(
        g1=1.0 + 0.1 * jax.random.normal(k1, (in_maps,), jnp.float32),
        b1=0.1 * jax.random.normal(k2, (in_maps,), jnp.float32),
        w1=0.1 * jax.random.normal(k3, (9, in_maps, out_maps), jnp.float32),
        g2=1.0 + 0.1 * jax.random.normal(k4, (out_maps,), jnp.float32),
        b2=0.1 * jax.random.normal(k5, (out_maps,), jnp.float32),
        w2=0.1 * jax.random.normal(k6, (9, out_maps, out_maps), jnp.float32),
    )
    if in_maps != out_maps:  # nn.Identity otherwise -> no weight at all
        p["wskip"] = 0.1 * jax.random.normal(
            k7, (out_maps, in_maps), jnp.float32)
    return p


if __name__ == "__main__":
    key = jax.random.PRNGKey(0)
    kx, kp, kx2, kp2 = jax.random.split(key, 4)

    # case 1: 1x1-conv skip (in_maps != out_maps); batch=4 -> 2 samples/step,
    # 2 grid steps (exercises the batched im2col path and v7x-friendly grid).
    n, in_maps, out_maps, h, w = 4, 4, 8, 16, 16
    x = jax.random.normal(kx, (n, in_maps, h, w), jnp.float32)
    params = make_params(kp, in_maps, out_maps)
    out = jax.block_until_ready(resnet_v2_block_ln(x, params))
    ref = jax.block_until_ready(reference_forward(x, params))
    assert out.shape == (n, out_maps, h, w), out.shape
    # tolerance sized for single-pass bf16 MXU matmuls (f32 accumulation)
    assert jnp.allclose(out, ref, atol=1e-2, rtol=1e-2), float(
        jnp.max(jnp.abs(out - ref)))

    # case 2: identity skip (in_maps == out_maps), 1 sample/step path
    x_i = jax.random.normal(kx2, (2, 8, h, w), jnp.float32)
    params_i = make_params(kp2, 8, 8)
    out_i = jax.block_until_ready(resnet_v2_block_ln(x_i, params_i))
    ref_i = jax.block_until_ready(reference_forward(x_i, params_i))
    assert out_i.shape == (2, 8, h, w), out_i.shape
    assert jnp.allclose(out_i, ref_i, atol=1e-2, rtol=1e-2), float(
        jnp.max(jnp.abs(out_i - ref_i)))

    print("KERNEL_OK")
</pallas_src>

<mosaic_0001>
module attributes {stable_mosaic.version = 11 : i64} {
  func.func @kernel(%arg0: i32, %arg1: memref<9x1x256xf32, #tpu.memory_space<vmem>>, %arg2: memref<2x16x256xf32, #tpu.memory_space<vmem>>, %arg3: memref<16x1xf32, #tpu.memory_space<vmem>>, %arg4: memref<16x1xf32, #tpu.memory_space<vmem>>, %arg5: memref<16x144xbf16, #tpu.memory_space<vmem>>, %arg6: memref<16x1xf32, #tpu.memory_space<vmem>>, %arg7: memref<16x1xf32, #tpu.memory_space<vmem>>, %arg8: memref<16x144xbf16, #tpu.memory_space<vmem>>, %arg9: memref<16x16xbf16, #tpu.memory_space<vmem>>, %arg10: memref<2x16x256xf32, #tpu.memory_space<vmem>>, %arg11: memref<144x512xbf16, #tpu.memory_space<vmem>>) attributes {dimension_semantics = [#tpu.dimension_semantics<parallel>], iteration_bounds = array<i64: 2>, scalar_prefetch = 0 : i64, scratch_operands = 1 : i64, tpu.core_type = #tpu.core_type<tc>, window_params = [{pipeline_mode = #tpu.pipeline_mode<synchronous>, transform_indices = @transform_0, window_bounds = array<i64: 9, 1, 256>}, {transform_indices = @transform_1, window_bounds = array<i64: 2, 16, 256>}, {pipeline_mode = #tpu.pipeline_mode<synchronous>, transform_indices = @transform_2, window_bounds = array<i64: 16, 1>}, {pipeline_mode = #tpu.pipeline_mode<synchronous>, transform_indices = @transform_3, window_bounds = array<i64: 16, 1>}, {pipeline_mode = #tpu.pipeline_mode<synchronous>, transform_indices = @transform_4, window_bounds = array<i64: 16, 144>}, {pipeline_mode = #tpu.pipeline_mode<synchronous>, transform_indices = @transform_5, window_bounds = array<i64: 16, 1>}, {pipeline_mode = #tpu.pipeline_mode<synchronous>, transform_indices = @transform_6, window_bounds = array<i64: 16, 1>}, {pipeline_mode = #tpu.pipeline_mode<synchronous>, transform_indices = @transform_7, window_bounds = array<i64: 16, 144>}, {pipeline_mode = #tpu.pipeline_mode<synchronous>, transform_indices = @transform_8, window_bounds = array<i64: 16, 16>}, {transform_indices = @transform_9, window_bounds = array<i64: 2, 16, 256>}]} {
    %c0 = arith.constant 0 : index
    %c0_0 = arith.constant 0 : index
    %c0_1 = arith.constant 0 : index
    %0 = vector.load %arg1[%c0, %c0_0, %c0_1] : memref<9x1x256xf32, #tpu.memory_space<vmem>>, vector<9x1x256xf32>
    %c0_2 = arith.constant 0 : index
    %c0_3 = arith.constant 0 : index
    %1 = vector.load %arg3[%c0_2, %c0_3] : memref<16x1xf32, #tpu.memory_space<vmem>>, vector<16x1xf32>
    %c0_4 = arith.constant 0 : index
    %c0_5 = arith.constant 0 : index
    %2 = vector.load %arg4[%c0_4, %c0_5] : memref<16x1xf32, #tpu.memory_space<vmem>>, vector<16x1xf32>
    %c0_6 = arith.constant 0 : index
    %c0_7 = arith.constant 0 : index
    %c0_8 = arith.constant 0 : index
    %3 = vector.load %arg2[%c0_6, %c0_7, %c0_8] : memref<2x16x256xf32, #tpu.memory_space<vmem>>, vector<1x16x256xf32>
    %4 = vector.shape_cast %3 : vector<1x16x256xf32> to vector<16x256xf32>
    %5 = arith.mulf %4, %4 : vector<16x256xf32>
    %6 = tpu.concatenate %4, %5 in 0 : vector<16x256xf32>, vector<16x256xf32> -> vector<32x256xf32>
    %cst = arith.constant dense<0.000000e+00> : vector<32xf32>
    %7 = vector.multi_reduction <add>, %6, %cst [1] : vector<32x256xf32> to vector<32xf32>
    %8 = vector.shape_cast %7 : vector<32xf32> to vector<32x1xf32>
    %9 = vector.extract_strided_slice %8 {offsets = [0, 0], sizes = [16, 1], strides = [1, 1]} : vector<32x1xf32> to vector<16x1xf32>
    %10 = vector.shape_cast %9 : vector<16x1xf32> to vector<1x16x1xf32>
    %cst_9 = arith.constant dense<0.000000e+00> : vector<1xf32>
    %11 = vector.multi_reduction <add>, %10, %cst_9 [1, 2] : vector<1x16x1xf32> to vector<1xf32>
    %12 = vector.shape_cast %11 : vector<1xf32> to vector<1x1x1xf32>
    %13 = vector.extract %12[0, 0, 0] : f32 from vector<1x1x1xf32>
    %14 = vector.extract_strided_slice %8 {offsets = [16, 0], sizes = [16, 1], strides = [1, 1]} : vector<32x1xf32> to vector<16x1xf32>
    %15 = vector.shape_cast %14 : vector<16x1xf32> to vector<1x16x1xf32>
    %cst_10 = arith.constant dense<0.000000e+00> : vector<1xf32>
    %16 = vector.multi_reduction <add>, %15, %cst_10 [1, 2] : vector<1x16x1xf32> to vector<1xf32>
    %17 = vector.shape_cast %16 : vector<1xf32> to vector<1x1x1xf32>
    %18 = vector.extract %17[0, 0, 0] : f32 from vector<1x1x1xf32>
    %cst_11 = arith.constant 9.765625E-4 : f32
    %19 = arith.mulf %13, %cst_11 : f32
    %cst_12 = arith.constant 9.765625E-4 : f32
    %20 = arith.mulf %18, %cst_12 : f32
    %21 = arith.mulf %19, %19 : f32
    %22 = arith.subf %20, %21 : f32
    %cst_13 = arith.constant 9.99999974E-6 : f32
    %23 = arith.addf %22, %cst_13 : f32
    %24 = math.rsqrt %23 : f32
    %25 = vector.broadcast %24 : f32 to vector<16x1xf32>
    %26 = arith.mulf %1, %25 : vector<16x1xf32>
    %27 = vector.broadcast %19 : f32 to vector<16x1xf32>
    %28 = arith.mulf %27, %26 : vector<16x1xf32>
    %29 = arith.subf %2, %28 : vector<16x1xf32>
    %30 = vector.broadcast %26 : vector<16x1xf32> to vector<16x256xf32>
    %31 = arith.mulf %4, %30 : vector<16x256xf32>
    %32 = vector.broadcast %29 : vector<16x1xf32> to vector<16x256xf32>
    %33 = arith.addf %31, %32 : vector<16x256xf32>
    %cst_14 = arith.constant 0.000000e+00 : f32
    %34 = vector.broadcast %cst_14 : f32 to vector<16x256xf32>
    %35 = arith.maximumf %33, %34 : vector<16x256xf32>
    %c17_i32 = arith.constant 17 : i32
    %36 = tpu.dynamic_rotate %35 by %c17_i32 dim 1 : vector<16x256xf32>, i32 -> vector<16x256xf32>
    %37 = vector.extract_strided_slice %0 {offsets = [0, 0, 0], sizes = [1, 1, 256], strides = [1, 1, 1]} : vector<9x1x256xf32> to vector<1x1x256xf32>
    %38 = vector.shape_cast %37 : vector<1x1x256xf32> to vector<1x256xf32>
    %39 = vector.broadcast %38 : vector<1x256xf32> to vector<16x256xf32>
    %40 = arith.mulf %36, %39 : vector<16x256xf32>
    %41 = arith.truncf %40 : vector<16x256xf32> to vector<16x256xbf16>
    %c0_15 = arith.constant 0 : index
    %c0_16 = arith.constant 0 : index
    %42 = vector.load %arg11[%c0_15, %c0_16] : memref<144x512xbf16, #tpu.memory_space<vmem>>, vector<16x256xbf16>
    tpu.vector_store %arg11[%c0_15, %c0_16], %41 {strides = array<i32>} : memref<144x512xbf16, #tpu.memory_space<vmem>>, vector<16x256xbf16>,
    %c16_i32 = arith.constant 16 : i32
    %43 = tpu.dynamic_rotate %35 by %c16_i32 dim 1 : vector<16x256xf32>, i32 -> vector<16x256xf32>
    %44 = vector.extract_strided_slice %0 {offsets = [1, 0, 0], sizes = [1, 1, 256], strides = [1, 1, 1]} : vector<9x1x256xf32> to vector<1x1x256xf32>
    %45 = vector.shape_cast %44 : vector<1x1x256xf32> to vector<1x256xf32>
    %46 = vector.broadcast %45 : vector<1x256xf32> to vector<16x256xf32>
    %47 = arith.mulf %43, %46 : vector<16x256xf32>
    %48 = arith.truncf %47 : vector<16x256xf32> to vector<16x256xbf16>
    %c16 = arith.constant 16 : index
    %c0_17 = arith.constant 0 : index
    %49 = vector.load %arg11[%c16, %c0_17] : memref<144x512xbf16, #tpu.memory_space<vmem>>, vector<16x256xbf16>
    tpu.vector_store %arg11[%c16, %c0_17], %48 {strides = array<i32>} : memref<144x512xbf16, #tpu.memory_space<vmem>>, vector<16x256xbf16>,
    %c15_i32 = arith.constant 15 : i32
    %50 = tpu.dynamic_rotate %35 by %c15_i32 dim 1 : vector<16x256xf32>, i32 -> vector<16x256xf32>
    %51 = vector.extract_strided_slice %0 {offsets = [2, 0, 0], sizes = [1, 1, 256], strides = [1, 1, 1]} : vector<9x1x256xf32> to vector<1x1x256xf32>
    %52 = vector.shape_cast %51 : vector<1x1x256xf32> to vector<1x256xf32>
    %53 = vector.broadcast %52 : vector<1x256xf32> to vector<16x256xf32>
    %54 = arith.mulf %50, %53 : vector<16x256xf32>
    %55 = arith.truncf %54 : vector<16x256xf32> to vector<16x256xbf16>
    %c32 = arith.constant 32 : index
    %c0_18 = arith.constant 0 : index
    %56 = vector.load %arg11[%c32, %c0_18] : memref<144x512xbf16, #tpu.memory_space<vmem>>, vector<16x256xbf16>
    tpu.vector_store %arg11[%c32, %c0_18], %55 {strides = array<i32>} : memref<144x512xbf16, #tpu.memory_space<vmem>>, vector<16x256xbf16>,
    %c1_i32 = arith.constant 1 : i32
    %57 = tpu.dynamic_rotate %35 by %c1_i32 dim 1 : vector<16x256xf32>, i32 -> vector<16x256xf32>
    %58 = vector.extract_strided_slice %0 {offsets = [3, 0, 0], sizes = [1, 1, 256], strides = [1, 1, 1]} : vector<9x1x256xf32> to vector<1x1x256xf32>
    %59 = vector.shape_cast %58 : vector<1x1x256xf32> to vector<1x256xf32>
    %60 = vector.broadcast %59 : vector<1x256xf32> to vector<16x256xf32>
    %61 = arith.mulf %57, %60 : vector<16x256xf32>
    %62 = arith.truncf %61 : vector<16x256xf32> to vector<16x256xbf16>
    %c48 = arith.constant 48 : index
    %c0_19 = arith.constant 0 : index
    %63 = vector.load %arg11[%c48, %c0_19] : memref<144x512xbf16, #tpu.memory_space<vmem>>, vector<16x256xbf16>
    tpu.vector_store %arg11[%c48, %c0_19], %62 {strides = array<i32>} : memref<144x512xbf16, #tpu.memory_space<vmem>>, vector<16x256xbf16>,
    %64 = arith.truncf %35 : vector<16x256xf32> to vector<16x256xbf16>
    %c64 = arith.constant 64 : index
    %c0_20 = arith.constant 0 : index
    %65 = vector.load %arg11[%c64, %c0_20] : memref<144x512xbf16, #tpu.memory_space<vmem>>, vector<16x256xbf16>
    tpu.vector_store %arg11[%c64, %c0_20], %64 {strides = array<i32>} : memref<144x512xbf16, #tpu.memory_space<vmem>>, vector<16x256xbf16>,
    %c255_i32 = arith.constant 255 : i32
    %66 = tpu.dynamic_rotate %35 by %c255_i32 dim 1 : vector<16x256xf32>, i32 -> vector<16x256xf32>
    %67 = vector.extract_strided_slice %0 {offsets = [5, 0, 0], sizes = [1, 1, 256], strides = [1, 1, 1]} : vector<9x1x256xf32> to vector<1x1x256xf32>
    %68 = vector.shape_cast %67 : vector<1x1x256xf32> to vector<1x256xf32>
    %69 = vector.broadcast %68 : vector<1x256xf32> to vector<16x256xf32>
    %70 = arith.mulf %66, %69 : vector<16x256xf32>
    %71 = arith.truncf %70 : vector<16x256xf32> to vector<16x256xbf16>
    %c80 = arith.constant 80 : index
    %c0_21 = arith.constant 0 : index
    %72 = vector.load %arg11[%c80, %c0_21] : memref<144x512xbf16, #tpu.memory_space<vmem>>, vector<16x256xbf16>
    tpu.vector_store %arg11[%c80, %c0_21], %71 {strides = array<i32>} : memref<144x512xbf16, #tpu.memory_space<vmem>>, vector<16x256xbf16>,
    %c241_i32 = arith.constant 241 : i32
    %73 = tpu.dynamic_rotate %35 by %c241_i32 dim 1 : vector<16x256xf32>, i32 -> vector<16x256xf32>
    %74 = vector.extract_strided_slice %0 {offsets = [6, 0, 0], sizes = [1, 1, 256], strides = [1, 1, 1]} : vector<9x1x256xf32> to vector<1x1x256xf32>
    %75 = vector.shape_cast %74 : vector<1x1x256xf32> to vector<1x256xf32>
    %76 = vector.broadcast %75 : vector<1x256xf32> to vector<16x256xf32>
    %77 = arith.mulf %73, %76 : vector<16x256xf32>
    %78 = arith.truncf %77 : vector<16x256xf32> to vector<16x256xbf16>
    %c96 = arith.constant 96 : index
    %c0_22 = arith.constant 0 : index
    %79 = vector.load %arg11[%c96, %c0_22] : memref<144x512xbf16, #tpu.memory_space<vmem>>, vector<16x256xbf16>
    tpu.vector_store %arg11[%c96, %c0_22], %78 {strides = array<i32>} : memref<144x512xbf16, #tpu.memory_space<vmem>>, vector<16x256xbf16>,
    %c240_i32 = arith.constant 240 : i32
    %80 = tpu.dynamic_rotate %35 by %c240_i32 dim 1 : vector<16x256xf32>, i32 -> vector<16x256xf32>
    %81 = vector.extract_strided_slice %0 {offsets = [7, 0, 0], sizes = [1, 1, 256], strides = [1, 1, 1]} : vector<9x1x256xf32> to vector<1x1x256xf32>
    %82 = vector.shape_cast %81 : vector<1x1x256xf32> to vector<1x256xf32>
    %83 = vector.broadcast %82 : vector<1x256xf32> to vector<16x256xf32>
    %84 = arith.mulf %80, %83 : vector<16x256xf32>
    %85 = arith.truncf %84 : vector<16x256xf32> to vector<16x256xbf16>
    %c112 = arith.constant 112 : index
    %c0_23 = arith.constant 0 : index
    %86 = vector.load %arg11[%c112, %c0_23] : memref<144x512xbf16, #tpu.memory_space<vmem>>, vector<16x256xbf16>
    tpu.vector_store %arg11[%c112, %c0_23], %85 {strides = array<i32>} : memref<144x512xbf16, #tpu.memory_space<vmem>>, vector<16x256xbf16>,
    %c239_i32 = arith.constant 239 : i32
    %87 = tpu.dynamic_rotate %35 by %c239_i32 dim 1 : vector<16x256xf32>, i32 -> vector<16x256xf32>
    %88 = vector.extract_strided_slice %0 {offsets = [8, 0, 0], sizes = [1, 1, 256], strides = [1, 1, 1]} : vector<9x1x256xf32> to vector<1x1x256xf32>
    %89 = vector.shape_cast %88 : vector<1x1x256xf32> to vector<1x256xf32>
    %90 = vector.broadcast %89 : vector<1x256xf32> to vector<16x256xf32>
    %91 = arith.mulf %87, %90 : vector<16x256xf32>
    %92 = arith.truncf %91 : vector<16x256xf32> to vector<16x256xbf16>
    %c128 = arith.constant 128 : index
    %c0_24 = arith.constant 0 : index
    %93 = vector.load %arg11[%c128, %c0_24] : memref<144x512xbf16, #tpu.memory_space<vmem>>, vector<16x256xbf16>
    tpu.vector_store %arg11[%c128, %c0_24], %92 {strides = array<i32>} : memref<144x512xbf16, #tpu.memory_space<vmem>>, vector<16x256xbf16>,
    %c1 = arith.constant 1 : index
    %c0_25 = arith.constant 0 : index
    %c0_26 = arith.constant 0 : index
    %94 = vector.load %arg2[%c1, %c0_25, %c0_26] : memref<2x16x256xf32, #tpu.memory_space<vmem>>, vector<1x16x256xf32>
    %95 = vector.shape_cast %94 : vector<1x16x256xf32> to vector<16x256xf32>
    %96 = arith.mulf %95, %95 : vector<16x256xf32>
    %97 = tpu.concatenate %95, %96 in 0 : vector<16x256xf32>, vector<16x256xf32> -> vector<32x256xf32>
    %cst_27 = arith.constant dense<0.000000e+00> : vector<32xf32>
    %98 = vector.multi_reduction <add>, %97, %cst_27 [1] : vector<32x256xf32> to vector<32xf32>
    %99 = vector.shape_cast %98 : vector<32xf32> to vector<32x1xf32>
    %100 = vector.extract_strided_slice %99 {offsets = [0, 0], sizes = [16, 1], strides = [1, 1]} : vector<32x1xf32> to vector<16x1xf32>
    %101 = vector.shape_cast %100 : vector<16x1xf32> to vector<1x16x1xf32>
    %cst_28 = arith.constant dense<0.000000e+00> : vector<1xf32>
    %102 = vector.multi_reduction <add>, %101, %cst_28 [1, 2] : vector<1x16x1xf32> to vector<1xf32>
    %103 = vector.shape_cast %102 : vector<1xf32> to vector<1x1x1xf32>
    %104 = vector.extract %103[0, 0, 0] : f32 from vector<1x1x1xf32>
    %105 = vector.extract_strided_slice %99 {offsets = [16, 0], sizes = [16, 1], strides = [1, 1]} : vector<32x1xf32> to vector<16x1xf32>
    %106 = vector.shape_cast %105 : vector<16x1xf32> to vector<1x16x1xf32>
    %cst_29 = arith.constant dense<0.000000e+00> : vector<1xf32>
    %107 = vector.multi_reduction <add>, %106, %cst_29 [1, 2] : vector<1x16x1xf32> to vector<1xf32>
    %108 = vector.shape_cast %107 : vector<1xf32> to vector<1x1x1xf32>
    %109 = vector.extract %108[0, 0, 0] : f32 from vector<1x1x1xf32>
    %cst_30 = arith.constant 9.765625E-4 : f32
    %110 = arith.mulf %104, %cst_30 : f32
    %cst_31 = arith.constant 9.765625E-4 : f32
    %111 = arith.mulf %109, %cst_31 : f32
    %112 = arith.mulf %110, %110 : f32
    %113 = arith.subf %111, %112 : f32
    %cst_32 = arith.constant 9.99999974E-6 : f32
    %114 = arith.addf %113, %cst_32 : f32
    %115 = math.rsqrt %114 : f32
    %116 = vector.broadcast %115 : f32 to vector<16x1xf32>
    %117 = arith.mulf %1, %116 : vector<16x1xf32>
    %118 = vector.broadcast %110 : f32 to vector<16x1xf32>
    %119 = arith.mulf %118, %117 : vector<16x1xf32>
    %120 = arith.subf %2, %119 : vector<16x1xf32>
    %121 = vector.broadcast %117 : vector<16x1xf32> to vector<16x256xf32>
    %122 = arith.mulf %95, %121 : vector<16x256xf32>
    %123 = vector.broadcast %120 : vector<16x1xf32> to vector<16x256xf32>
    %124 = arith.addf %122, %123 : vector<16x256xf32>
    %cst_33 = arith.constant 0.000000e+00 : f32
    %125 = vector.broadcast %cst_33 : f32 to vector<16x256xf32>
    %126 = arith.maximumf %124, %125 : vector<16x256xf32>
    %c17_i32_34 = arith.constant 17 : i32
    %127 = tpu.dynamic_rotate %126 by %c17_i32_34 dim 1 : vector<16x256xf32>, i32 -> vector<16x256xf32>
    %128 = vector.extract_strided_slice %0 {offsets = [0, 0, 0], sizes = [1, 1, 256], strides = [1, 1, 1]} : vector<9x1x256xf32> to vector<1x1x256xf32>
    %129 = vector.shape_cast %128 : vector<1x1x256xf32> to vector<1x256xf32>
    %130 = vector.broadcast %129 : vector<1x256xf32> to vector<16x256xf32>
    %131 = arith.mulf %127, %130 : vector<16x256xf32>
    %132 = arith.truncf %131 : vector<16x256xf32> to vector<16x256xbf16>
    %c0_35 = arith.constant 0 : index
    %c256 = arith.constant 256 : index
    %133 = vector.load %arg11[%c0_35, %c256] : memref<144x512xbf16, #tpu.memory_space<vmem>>, vector<16x256xbf16>
    tpu.vector_store %arg11[%c0_35, %c256], %132 {strides = array<i32>} : memref<144x512xbf16, #tpu.memory_space<vmem>>, vector<16x256xbf16>,
    %c16_i32_36 = arith.constant 16 : i32
    %134 = tpu.dynamic_rotate %126 by %c16_i32_36 dim 1 : vector<16x256xf32>, i32 -> vector<16x256xf32>
    %135 = vector.extract_strided_slice %0 {offsets = [1, 0, 0], sizes = [1, 1, 256], strides = [1, 1, 1]} : vector<9x1x256xf32> to vector<1x1x256xf32>
    %136 = vector.shape_cast %135 : vector<1x1x256xf32> to vector<1x256xf32>
    %137 = vector.broadcast %136 : vector<1x256xf32> to vector<16x256xf32>
    %138 = arith.mulf %134, %137 : vector<16x256xf32>
    %139 = arith.truncf %138 : vector<16x256xf32> to vector<16x256xbf16>
    %c16_37 = arith.constant 16 : index
    %c256_38 = arith.constant 256 : index
    %140 = vector.load %arg11[%c16_37, %c256_38] : memref<144x512xbf16, #tpu.memory_space<vmem>>, vector<16x256xbf16>
    tpu.vector_store %arg11[%c16_37, %c256_38], %139 {strides = array<i32>} : memref<144x512xbf16, #tpu.memory_space<vmem>>, vector<16x256xbf16>,
    %c15_i32_39 = arith.constant 15 : i32
    %141 = tpu.dynamic_rotate %126 by %c15_i32_39 dim 1 : vector<16x256xf32>, i32 -> vector<16x256xf32>
    %142 = vector.extract_strided_slice %0 {offsets = [2, 0, 0], sizes = [1, 1, 256], strides = [1, 1, 1]} : vector<9x1x256xf32> to vector<1x1x256xf32>
    %143 = vector.shape_cast %142 : vector<1x1x256xf32> to vector<1x256xf32>
    %144 = vector.broadcast %143 : vector<1x256xf32> to vector<16x256xf32>
    %145 = arith.mulf %141, %144 : vector<16x256xf32>
    %146 = arith.truncf %145 : vector<16x256xf32> to vector<16x256xbf16>
    %c32_40 = arith.constant 32 : index
    %c256_41 = arith.constant 256 : index
    %147 = vector.load %arg11[%c32_40, %c256_41] : memref<144x512xbf16, #tpu.memory_space<vmem>>, vector<16x256xbf16>
    tpu.vector_store %arg11[%c32_40, %c256_41], %146 {strides = array<i32>} : memref<144x512xbf16, #tpu.memory_space<vmem>>, vector<16x256xbf16>,
    %c1_i32_42 = arith.constant 1 : i32
    %148 = tpu.dynamic_rotate %126 by %c1_i32_42 dim 1 : vector<16x256xf32>, i32 -> vector<16x256xf32>
    %149 = vector.extract_strided_slice %0 {offsets = [3, 0, 0], sizes = [1, 1, 256], strides = [1, 1, 1]} : vector<9x1x256xf32> to vector<1x1x256xf32>
    %150 = vector.shape_cast %149 : vector<1x1x256xf32> to vector<1x256xf32>
    %151 = vector.broadcast %150 : vector<1x256xf32> to vector<16x256xf32>
    %152 = arith.mulf %148, %151 : vector<16x256xf32>
    %153 = arith.truncf %152 : vector<16x256xf32> to vector<16x256xbf16>
    %c48_43 = arith.constant 48 : index
    %c256_44 = arith.constant 256 : index
    %154 = vector.load %arg11[%c48_43, %c256_44] : memref<144x512xbf16, #tpu.memory_space<vmem>>, vector<16x256xbf16>
    tpu.vector_store %arg11[%c48_43, %c256_44], %153 {strides = array<i32>} : memref<144x512xbf16, #tpu.memory_space<vmem>>, vector<16x256xbf16>,
    %155 = arith.truncf %126 : vector<16x256xf32> to vector<16x256xbf16>
    %c64_45 = arith.constant 64 : index
    %c256_46 = arith.constant 256 : index
    %156 = vector.load %arg11[%c64_45, %c256_46] : memref<144x512xbf16, #tpu.memory_space<vmem>>, vector<16x256xbf16>
    tpu.vector_store %arg11[%c64_45, %c256_46], %155 {strides = array<i32>} : memref<144x512xbf16, #tpu.memory_space<vmem>>, vector<16x256xbf16>,
    %c255_i32_47 = arith.constant 255 : i32
    %157 = tpu.dynamic_rotate %126 by %c255_i32_47 dim 1 : vector<16x256xf32>, i32 -> vector<16x256xf32>
    %158 = vector.extract_strided_slice %0 {offsets = [5, 0, 0], sizes = [1, 1, 256], strides = [1, 1, 1]} : vector<9x1x256xf32> to vector<1x1x256xf32>
    %159 = vector.shape_cast %158 : vector<1x1x256xf32> to vector<1x256xf32>
    %160 = vector.broadcast %159 : vector<1x256xf32> to vector<16x256xf32>
    %161 = arith.mulf %157, %160 : vector<16x256xf32>
    %162 = arith.truncf %161 : vector<16x256xf32> to vector<16x256xbf16>
    %c80_48 = arith.constant 80 : index
    %c256_49 = arith.constant 256 : index
    %163 = vector.load %arg11[%c80_48, %c256_49] : memref<144x512xbf16, #tpu.memory_space<vmem>>, vector<16x256xbf16>
    tpu.vector_store %arg11[%c80_48, %c256_49], %162 {strides = array<i32>} : memref<144x512xbf16, #tpu.memory_space<vmem>>, vector<16x256xbf16>,
    %c241_i32_50 = arith.constant 241 : i32
    %164 = tpu.dynamic_rotate %126 by %c241_i32_50 dim 1 : vector<16x256xf32>, i32 -> vector<16x256xf32>
    %165 = vector.extract_strided_slice %0 {offsets = [6, 0, 0], sizes = [1, 1, 256], strides = [1, 1, 1]} : vector<9x1x256xf32> to vector<1x1x256xf32>
    %166 = vector.shape_cast %165 : vector<1x1x256xf32> to vector<1x256xf32>
    %167 = vector.broadcast %166 : vector<1x256xf32> to vector<16x256xf32>
    %168 = arith.mulf %164, %167 : vector<16x256xf32>
    %169 = arith.truncf %168 : vector<16x256xf32> to vector<16x256xbf16>
    %c96_51 = arith.constant 96 : index
    %c256_52 = arith.constant 256 : index
    %170 = vector.load %arg11[%c96_51, %c256_52] : memref<144x512xbf16, #tpu.memory_space<vmem>>, vector<16x256xbf16>
    tpu.vector_store %arg11[%c96_51, %c256_52], %169 {strides = array<i32>} : memref<144x512xbf16, #tpu.memory_space<vmem>>, vector<16x256xbf16>,
    %c240_i32_53 = arith.constant 240 : i32
    %171 = tpu.dynamic_rotate %126 by %c240_i32_53 dim 1 : vector<16x256xf32>, i32 -> vector<16x256xf32>
    %172 = vector.extract_strided_slice %0 {offsets = [7, 0, 0], sizes = [1, 1, 256], strides = [1, 1, 1]} : vector<9x1x256xf32> to vector<1x1x256xf32>
    %173 = vector.shape_cast %172 : vector<1x1x256xf32> to vector<1x256xf32>
    %174 = vector.broadcast %173 : vector<1x256xf32> to vector<16x256xf32>
    %175 = arith.mulf %171, %174 : vector<16x256xf32>
    %176 = arith.truncf %175 : vector<16x256xf32> to vector<16x256xbf16>
    %c112_54 = arith.constant 112 : index
    %c256_55 = arith.constant 256 : index
    %177 = vector.load %arg11[%c112_54, %c256_55] : memref<144x512xbf16, #tpu.memory_space<vmem>>, vector<16x256xbf16>
    tpu.vector_store %arg11[%c112_54, %c256_55], %176 {strides = array<i32>} : memref<144x512xbf16, #tpu.memory_space<vmem>>, vector<16x256xbf16>,
    %c239_i32_56 = arith.constant 239 : i32
    %178 = tpu.dynamic_rotate %126 by %c239_i32_56 dim 1 : vector<16x256xf32>, i32 -> vector<16x256xf32>
    %179 = vector.extract_strided_slice %0 {offsets = [8, 0, 0], sizes = [1, 1, 256], strides = [1, 1, 1]} : vector<9x1x256xf32> to vector<1x1x256xf32>
    %180 = vector.shape_cast %179 : vector<1x1x256xf32> to vector<1x256xf32>
    %181 = vector.broadcast %180 : vector<1x256xf32> to vector<16x256xf32>
    %182 = arith.mulf %178, %181 : vector<16x256xf32>
    %183 = arith.truncf %182 : vector<16x256xf32> to vector<16x256xbf16>
    %c128_57 = arith.constant 128 : index
    %c256_58 = arith.constant 256 : index
    %184 = vector.load %arg11[%c128_57, %c256_58] : memref<144x512xbf16, #tpu.memory_space<vmem>>, vector<16x256xbf16>
    tpu.vector_store %arg11[%c128_57, %c256_58], %183 {strides = array<i32>} : memref<144x512xbf16, #tpu.memory_space<vmem>>, vector<16x256xbf16>,
    %c0_59 = arith.constant 0 : index
    %c0_60 = arith.constant 0 : index
    %185 = vector.load %arg5[%c0_59, %c0_60] : memref<16x144xbf16, #tpu.memory_space<vmem>>, vector<16x144xbf16>
    %c0_61 = arith.constant 0 : index
    %c0_62 = arith.constant 0 : index
    %186 = vector.load %arg11[%c0_61, %c0_62] : memref<144x512xbf16, #tpu.memory_space<vmem>>, vector<144x512xbf16>
    %cst_63 = arith.constant dense<0.000000e+00> : vector<16x512xf32>
    %187 = tpu.matmul %185, %186, %cst_63 {dimension_numbers = #tpu.dot_dimension_numbers<[1], [0], [0], [1], [0, 0, 1, 1], [], []>} : vector<16x144xbf16>, vector<144x512xbf16>, vector<16x512xf32> -> vector<16x512xf32>
    %c0_64 = arith.constant 0 : index
    %c0_65 = arith.constant 0 : index
    %188 = vector.load %arg6[%c0_64, %c0_65] : memref<16x1xf32, #tpu.memory_space<vmem>>, vector<16x1xf32>
    %c0_66 = arith.constant 0 : index
    %c0_67 = arith.constant 0 : index
    %189 = vector.load %arg7[%c0_66, %c0_67] : memref<16x1xf32, #tpu.memory_space<vmem>>, vector<16x1xf32>
    %190 = vector.extract_strided_slice %187 {offsets = [0, 0], sizes = [16, 256], strides = [1, 1]} : vector<16x512xf32> to vector<16x256xf32>
    %191 = arith.mulf %190, %190 : vector<16x256xf32>
    %192 = tpu.concatenate %190, %191 in 0 : vector<16x256xf32>, vector<16x256xf32> -> vector<32x256xf32>
    %cst_68 = arith.constant dense<0.000000e+00> : vector<32xf32>
    %193 = vector.multi_reduction <add>, %192, %cst_68 [1] : vector<32x256xf32> to vector<32xf32>
    %194 = vector.shape_cast %193 : vector<32xf32> to vector<32x1xf32>
    %195 = vector.extract_strided_slice %194 {offsets = [0, 0], sizes = [16, 1], strides = [1, 1]} : vector<32x1xf32> to vector<16x1xf32>
    %196 = vector.shape_cast %195 : vector<16x1xf32> to vector<1x16x1xf32>
    %cst_69 = arith.constant dense<0.000000e+00> : vector<1xf32>
    %197 = vector.multi_reduction <add>, %196, %cst_69 [1, 2] : vector<1x16x1xf32> to vector<1xf32>
    %198 = vector.shape_cast %197 : vector<1xf32> to vector<1x1x1xf32>
    %199 = vector.extract %198[0, 0, 0] : f32 from vector<1x1x1xf32>
    %200 = vector.extract_strided_slice %194 {offsets = [16, 0], sizes = [16, 1], strides = [1, 1]} : vector<32x1xf32> to vector<16x1xf32>
    %201 = vector.shape_cast %200 : vector<16x1xf32> to vector<1x16x1xf32>
    %cst_70 = arith.constant dense<0.000000e+00> : vector<1xf32>
    %202 = vector.multi_reduction <add>, %201, %cst_70 [1, 2] : vector<1x16x1xf32> to vector<1xf32>
    %203 = vector.shape_cast %202 : vector<1xf32> to vector<1x1x1xf32>
    %204 = vector.extract %203[0, 0, 0] : f32 from vector<1x1x1xf32>
    %cst_71 = arith.constant 4.8828125E-4 : f32
    %205 = arith.mulf %199, %cst_71 : f32
    %cst_72 = arith.constant 4.8828125E-4 : f32
    %206 = arith.mulf %204, %cst_72 : f32
    %207 = arith.mulf %205, %205 : f32
    %208 = arith.subf %206, %207 : f32
    %cst_73 = arith.constant 9.99999974E-6 : f32
    %209 = arith.addf %208, %cst_73 : f32
    %210 = math.rsqrt %209 : f32
    %211 = vector.broadcast %210 : f32 to vector<16x1xf32>
    %212 = arith.mulf %188, %211 : vector<16x1xf32>
    %213 = vector.broadcast %205 : f32 to vector<16x1xf32>
    %214 = arith.mulf %213, %212 : vector<16x1xf32>
    %215 = arith.subf %189, %214 : vector<16x1xf32>
    %216 = vector.broadcast %212 : vector<16x1xf32> to vector<16x256xf32>
    %217 = arith.mulf %190, %216 : vector<16x256xf32>
    %218 = vector.broadcast %215 : vector<16x1xf32> to vector<16x256xf32>
    %219 = arith.addf %217, %218 : vector<16x256xf32>
    %cst_74 = arith.constant 0.000000e+00 : f32
    %220 = vector.broadcast %cst_74 : f32 to vector<16x256xf32>
    %221 = arith.maximumf %219, %220 : vector<16x256xf32>
    %c17_i32_75 = arith.constant 17 : i32
    %222 = tpu.dynamic_rotate %221 by %c17_i32_75 dim 1 : vector<16x256xf32>, i32 -> vector<16x256xf32>
    %223 = vector.extract_strided_slice %0 {offsets = [0, 0, 0], sizes = [1, 1, 256], strides = [1, 1, 1]} : vector<9x1x256xf32> to vector<1x1x256xf32>
    %224 = vector.shape_cast %223 : vector<1x1x256xf32> to vector<1x256xf32>
    %225 = vector.broadcast %224 : vector<1x256xf32> to vector<16x256xf32>
    %226 = arith.mulf %222, %225 : vector<16x256xf32>
    %227 = arith.truncf %226 : vector<16x256xf32> to vector<16x256xbf16>
    %c0_76 = arith.constant 0 : index
    %c0_77 = arith.constant 0 : index
    %228 = vector.load %arg11[%c0_76, %c0_77] : memref<144x512xbf16, #tpu.memory_space<vmem>>, vector<16x256xbf16>
    tpu.vector_store %arg11[%c0_76, %c0_77], %227 {strides = array<i32>} : memref<144x512xbf16, #tpu.memory_space<vmem>>, vector<16x256xbf16>,
    %c16_i32_78 = arith.constant 16 : i32
    %229 = tpu.dynamic_rotate %221 by %c16_i32_78 dim 1 : vector<16x256xf32>, i32 -> vector<16x256xf32>
    %230 = vector.extract_strided_slice %0 {offsets = [1, 0, 0], sizes = [1, 1, 256], strides = [1, 1, 1]} : vector<9x1x256xf32> to vector<1x1x256xf32>
    %231 = vector.shape_cast %230 : vector<1x1x256xf32> to vector<1x256xf32>
    %232 = vector.broadcast %231 : vector<1x256xf32> to vector<16x256xf32>
    %233 = arith.mulf %229, %232 : vector<16x256xf32>
    %234 = arith.truncf %233 : vector<16x256xf32> to vector<16x256xbf16>
    %c16_79 = arith.constant 16 : index
    %c0_80 = arith.constant 0 : index
    %235 = vector.load %arg11[%c16_79, %c0_80] : memref<144x512xbf16, #tpu.memory_space<vmem>>, vector<16x256xbf16>
    tpu.vector_store %arg11[%c16_79, %c0_80], %234 {strides = array<i32>} : memref<144x512xbf16, #tpu.memory_space<vmem>>, vector<16x256xbf16>,
    %c15_i32_81 = arith.constant 15 : i32
    %236 = tpu.dynamic_rotate %221 by %c15_i32_81 dim 1 : vector<16x256xf32>, i32 -> vector<16x256xf32>
    %237 = vector.extract_strided_slice %0 {offsets = [2, 0, 0], sizes = [1, 1, 256], strides = [1, 1, 1]} : vector<9x1x256xf32> to vector<1x1x256xf32>
    %238 = vector.shape_cast %237 : vector<1x1x256xf32> to vector<1x256xf32>
    %239 = vector.broadcast %238 : vector<1x256xf32> to vector<16x256xf32>
    %240 = arith.mulf %236, %239 : vector<16x256xf32>
    %241 = arith.truncf %240 : vector<16x256xf32> to vector<16x256xbf16>
    %c32_82 = arith.constant 32 : index
    %c0_83 = arith.constant 0 : index
    %242 = vector.load %arg11[%c32_82, %c0_83] : memref<144x512xbf16, #tpu.memory_space<vmem>>, vector<16x256xbf16>
    tpu.vector_store %arg11[%c32_82, %c0_83], %241 {strides = array<i32>} : memref<144x512xbf16, #tpu.memory_space<vmem>>, vector<16x256xbf16>,
    %c1_i32_84 = arith.constant 1 : i32
    %243 = tpu.dynamic_rotate %221 by %c1_i32_84 dim 1 : vector<16x256xf32>, i32 -> vector<16x256xf32>
    %244 = vector.extract_strided_slice %0 {offsets = [3, 0, 0], sizes = [1, 1, 256], strides = [1, 1, 1]} : vector<9x1x256xf32> to vector<1x1x256xf32>
    %245 = vector.shape_cast %244 : vector<1x1x256xf32> to vector<1x256xf32>
    %246 = vector.broadcast %245 : vector<1x256xf32> to vector<16x256xf32>
    %247 = arith.mulf %243, %246 : vector<16x256xf32>
    %248 = arith.truncf %247 : vector<16x256xf32> to vector<16x256xbf16>
    %c48_85 = arith.constant 48 : index
    %c0_86 = arith.constant 0 : index
    %249 = vector.load %arg11[%c48_85, %c0_86] : memref<144x512xbf16, #tpu.memory_space<vmem>>, vector<16x256xbf16>
    tpu.vector_store %arg11[%c48_85, %c0_86], %248 {strides = array<i32>} : memref<144x512xbf16, #tpu.memory_space<vmem>>, vector<16x256xbf16>,
    %250 = arith.truncf %221 : vector<16x256xf32> to vector<16x256xbf16>
    %c64_87 = arith.constant 64 : index
    %c0_88 = arith.constant 0 : index
    %251 = vector.load %arg11[%c64_87, %c0_88] : memref<144x512xbf16, #tpu.memory_space<vmem>>, vector<16x256xbf16>
    tpu.vector_store %arg11[%c64_87, %c0_88], %250 {strides = array<i32>} : memref<144x512xbf16, #tpu.memory_space<vmem>>, vector<16x256xbf16>,
    %c255_i32_89 = arith.constant 255 : i32
    %252 = tpu.dynamic_rotate %221 by %c255_i32_89 dim 1 : vector<16x256xf32>, i32 -> vector<16x256xf32>
    %253 = vector.extract_strided_slice %0 {offsets = [5, 0, 0], sizes = [1, 1, 256], strides = [1, 1, 1]} : vector<9x1x256xf32> to vector<1x1x256xf32>
    %254 = vector.shape_cast %253 : vector<1x1x256xf32> to vector<1x256xf32>
    %255 = vector.broadcast %254 : vector<1x256xf32> to vector<16x256xf32>
    %256 = arith.mulf %252, %255 : vector<16x256xf32>
    %257 = arith.truncf %256 : vector<16x256xf32> to vector<16x256xbf16>
    %c80_90 = arith.constant 80 : index
    %c0_91 = arith.constant 0 : index
    %258 = vector.load %arg11[%c80_90, %c0_91] : memref<144x512xbf16, #tpu.memory_space<vmem>>, vector<16x256xbf16>
    tpu.vector_store %arg11[%c80_90, %c0_91], %257 {strides = array<i32>} : memref<144x512xbf16, #tpu.memory_space<vmem>>, vector<16x256xbf16>,
    %c241_i32_92 = arith.constant 241 : i32
    %259 = tpu.dynamic_rotate %221 by %c241_i32_92 dim 1 : vector<16x256xf32>, i32 -> vector<16x256xf32>
    %260 = vector.extract_strided_slice %0 {offsets = [6, 0, 0], sizes = [1, 1, 256], strides = [1, 1, 1]} : vector<9x1x256xf32> to vector<1x1x256xf32>
    %261 = vector.shape_cast %260 : vector<1x1x256xf32> to vector<1x256xf32>
    %262 = vector.broadcast %261 : vector<1x256xf32> to vector<16x256xf32>
    %263 = arith.mulf %259, %262 : vector<16x256xf32>
    %264 = arith.truncf %263 : vector<16x256xf32> to vector<16x256xbf16>
    %c96_93 = arith.constant 96 : index
    %c0_94 = arith.constant 0 : index
    %265 = vector.load %arg11[%c96_93, %c0_94] : memref<144x512xbf16, #tpu.memory_space<vmem>>, vector<16x256xbf16>
    tpu.vector_store %arg11[%c96_93, %c0_94], %264 {strides = array<i32>} : memref<144x512xbf16, #tpu.memory_space<vmem>>, vector<16x256xbf16>,
    %c240_i32_95 = arith.constant 240 : i32
    %266 = tpu.dynamic_rotate %221 by %c240_i32_95 dim 1 : vector<16x256xf32>, i32 -> vector<16x256xf32>
    %267 = vector.extract_strided_slice %0 {offsets = [7, 0, 0], sizes = [1, 1, 256], strides = [1, 1, 1]} : vector<9x1x256xf32> to vector<1x1x256xf32>
    %268 = vector.shape_cast %267 : vector<1x1x256xf32> to vector<1x256xf32>
    %269 = vector.broadcast %268 : vector<1x256xf32> to vector<16x256xf32>
    %270 = arith.mulf %266, %269 : vector<16x256xf32>
    %271 = arith.truncf %270 : vector<16x256xf32> to vector<16x256xbf16>
    %c112_96 = arith.constant 112 : index
    %c0_97 = arith.constant 0 : index
    %272 = vector.load %arg11[%c112_96, %c0_97] : memref<144x512xbf16, #tpu.memory_space<vmem>>, vector<16x256xbf16>
    tpu.vector_store %arg11[%c112_96, %c0_97], %271 {strides = array<i32>} : memref<144x512xbf16, #tpu.memory_space<vmem>>, vector<16x256xbf16>,
    %c239_i32_98 = arith.constant 239 : i32
    %273 = tpu.dynamic_rotate %221 by %c239_i32_98 dim 1 : vector<16x256xf32>, i32 -> vector<16x256xf32>
    %274 = vector.extract_strided_slice %0 {offsets = [8, 0, 0], sizes = [1, 1, 256], strides = [1, 1, 1]} : vector<9x1x256xf32> to vector<1x1x256xf32>
    %275 = vector.shape_cast %274 : vector<1x1x256xf32> to vector<1x256xf32>
    %276 = vector.broadcast %275 : vector<1x256xf32> to vector<16x256xf32>
    %277 = arith.mulf %273, %276 : vector<16x256xf32>
    %278 = arith.truncf %277 : vector<16x256xf32> to vector<16x256xbf16>
    %c128_99 = arith.constant 128 : index
    %c0_100 = arith.constant 0 : index
    %279 = vector.load %arg11[%c128_99, %c0_100] : memref<144x512xbf16, #tpu.memory_space<vmem>>, vector<16x256xbf16>
    tpu.vector_store %arg11[%c128_99, %c0_100], %278 {strides = array<i32>} : memref<144x512xbf16, #tpu.memory_space<vmem>>, vector<16x256xbf16>,
    %280 = vector.extract_strided_slice %187 {offsets = [0, 256], sizes = [16, 256], strides = [1, 1]} : vector<16x512xf32> to vector<16x256xf32>
    %281 = arith.mulf %280, %280 : vector<16x256xf32>
    %282 = tpu.concatenate %280, %281 in 0 : vector<16x256xf32>, vector<16x256xf32> -> vector<32x256xf32>
    %cst_101 = arith.constant dense<0.000000e+00> : vector<32xf32>
    %283 = vector.multi_reduction <add>, %282, %cst_101 [1] : vector<32x256xf32> to vector<32xf32>
    %284 = vector.shape_cast %283 : vector<32xf32> to vector<32x1xf32>
    %285 = vector.extract_strided_slice %284 {offsets = [0, 0], sizes = [16, 1], strides = [1, 1]} : vector<32x1xf32> to vector<16x1xf32>
    %286 = vector.shape_cast %285 : vector<16x1xf32> to vector<1x16x1xf32>
    %cst_102 = arith.constant dense<0.000000e+00> : vector<1xf32>
    %287 = vector.multi_reduction <add>, %286, %cst_102 [1, 2] : vector<1x16x1xf32> to vector<1xf32>
    %288 = vector.shape_cast %287 : vector<1xf32> to vector<1x1x1xf32>
    %289 = vector.extract %288[0, 0, 0] : f32 from vector<1x1x1xf32>
    %290 = vector.extract_strided_slice %284 {offsets = [16, 0], sizes = [16, 1], strides = [1, 1]} : vector<32x1xf32> to vector<16x1xf32>
    %291 = vector.shape_cast %290 : vector<16x1xf32> to vector<1x16x1xf32>
    %cst_103 = arith.constant dense<0.000000e+00> : vector<1xf32>
    %292 = vector.multi_reduction <add>, %291, %cst_103 [1, 2] : vector<1x16x1xf32> to vector<1xf32>
    %293 = vector.shape_cast %292 : vector<1xf32> to vector<1x1x1xf32>
    %294 = vector.extract %293[0, 0, 0] : f32 from vector<1x1x1xf32>
    %cst_104 = arith.constant 4.8828125E-4 : f32
    %295 = arith.mulf %289, %cst_104 : f32
    %cst_105 = arith.constant 4.8828125E-4 : f32
    %296 = arith.mulf %294, %cst_105 : f32
    %297 = arith.mulf %295, %295 : f32
    %298 = arith.subf %296, %297 : f32
    %cst_106 = arith.constant 9.99999974E-6 : f32
    %299 = arith.addf %298, %cst_106 : f32
    %300 = math.rsqrt %299 : f32
    %301 = vector.broadcast %300 : f32 to vector<16x1xf32>
    %302 = arith.mulf %188, %301 : vector<16x1xf32>
    %303 = vector.broadcast %295 : f32 to vector<16x1xf32>
    %304 = arith.mulf %303, %302 : vector<16x1xf32>
    %305 = arith.subf %189, %304 : vector<16x1xf32>
    %306 = vector.broadcast %302 : vector<16x1xf32> to vector<16x256xf32>
    %307 = arith.mulf %280, %306 : vector<16x256xf32>
    %308 = vector.broadcast %305 : vector<16x1xf32> to vector<16x256xf32>
    %309 = arith.addf %307, %308 : vector<16x256xf32>
    %cst_107 = arith.constant 0.000000e+00 : f32
    %310 = vector.broadcast %cst_107 : f32 to vector<16x256xf32>
    %311 = arith.maximumf %309, %310 : vector<16x256xf32>
    %c17_i32_108 = arith.constant 17 : i32
    %312 = tpu.dynamic_rotate %311 by %c17_i32_108 dim 1 : vector<16x256xf32>, i32 -> vector<16x256xf32>
    %313 = vector.extract_strided_slice %0 {offsets = [0, 0, 0], sizes = [1, 1, 256], strides = [1, 1, 1]} : vector<9x1x256xf32> to vector<1x1x256xf32>
    %314 = vector.shape_cast %313 : vector<1x1x256xf32> to vector<1x256xf32>
    %315 = vector.broadcast %314 : vector<1x256xf32> to vector<16x256xf32>
    %316 = arith.mulf %312, %315 : vector<16x256xf32>
    %317 = arith.truncf %316 : vector<16x256xf32> to vector<16x256xbf16>
    %c0_109 = arith.constant 0 : index
    %c256_110 = arith.constant 256 : index
    %318 = vector.load %arg11[%c0_109, %c256_110] : memref<144x512xbf16, #tpu.memory_space<vmem>>, vector<16x256xbf16>
    tpu.vector_store %arg11[%c0_109, %c256_110], %317 {strides = array<i32>} : memref<144x512xbf16, #tpu.memory_space<vmem>>, vector<16x256xbf16>,
    %c16_i32_111 = arith.constant 16 : i32
    %319 = tpu.dynamic_rotate %311 by %c16_i32_111 dim 1 : vector<16x256xf32>, i32 -> vector<16x256xf32>
    %320 = vector.extract_strided_slice %0 {offsets = [1, 0, 0], sizes = [1, 1, 256], strides = [1, 1, 1]} : vector<9x1x256xf32> to vector<1x1x256xf32>
    %321 = vector.shape_cast %320 : vector<1x1x256xf32> to vector<1x256xf32>
    %322 = vector.broadcast %321 : vector<1x256xf32> to vector<16x256xf32>
    %323 = arith.mulf %319, %322 : vector<16x256xf32>
    %324 = arith.truncf %323 : vector<16x256xf32> to vector<16x256xbf16>
    %c16_112 = arith.constant 16 : index
    %c256_113 = arith.constant 256 : index
    %325 = vector.load %arg11[%c16_112, %c256_113] : memref<144x512xbf16, #tpu.memory_space<vmem>>, vector<16x256xbf16>
    tpu.vector_store %arg11[%c16_112, %c256_113], %324 {strides = array<i32>} : memref<144x512xbf16, #tpu.memory_space<vmem>>, vector<16x256xbf16>,
    %c15_i32_114 = arith.constant 15 : i32
    %326 = tpu.dynamic_rotate %311 by %c15_i32_114 dim 1 : vector<16x256xf32>, i32 -> vector<16x256xf32>
    %327 = vector.extract_strided_slice %0 {offsets = [2, 0, 0], sizes = [1, 1, 256], strides = [1, 1, 1]} : vector<9x1x256xf32> to vector<1x1x256xf32>
    %328 = vector.shape_cast %327 : vector<1x1x256xf32> to vector<1x256xf32>
    %329 = vector.broadcast %328 : vector<1x256xf32> to vector<16x256xf32>
    %330 = arith.mulf %326, %329 : vector<16x256xf32>
    %331 = arith.truncf %330 : vector<16x256xf32> to vector<16x256xbf16>
    %c32_115 = arith.constant 32 : index
    %c256_116 = arith.constant 256 : index
    %332 = vector.load %arg11[%c32_115, %c256_116] : memref<144x512xbf16, #tpu.memory_space<vmem>>, vector<16x256xbf16>
    tpu.vector_store %arg11[%c32_115, %c256_116], %331 {strides = array<i32>} : memref<144x512xbf16, #tpu.memory_space<vmem>>, vector<16x256xbf16>,
    %c1_i32_117 = arith.constant 1 : i32
    %333 = tpu.dynamic_rotate %311 by %c1_i32_117 dim 1 : vector<16x256xf32>, i32 -> vector<16x256xf32>
    %334 = vector.extract_strided_slice %0 {offsets = [3, 0, 0], sizes = [1, 1, 256], strides = [1, 1, 1]} : vector<9x1x256xf32> to vector<1x1x256xf32>
    %335 = vector.shape_cast %334 : vector<1x1x256xf32> to vector<1x256xf32>
    %336 = vector.broadcast %335 : vector<1x256xf32> to vector<16x256xf32>
    %337 = arith.mulf %333, %336 : vector<16x256xf32>
    %338 = arith.truncf %337 : vector<16x256xf32> to vector<16x256xbf16>
    %c48_118 = arith.constant 48 : index
    %c256_119 = arith.constant 256 : index
    %339 = vector.load %arg11[%c48_118, %c256_119] : memref<144x512xbf16, #tpu.memory_space<vmem>>, vector<16x256xbf16>
    tpu.vector_store %arg11[%c48_118, %c256_119], %338 {strides = array<i32>} : memref<144x512xbf16, #tpu.memory_space<vmem>>, vector<16x256xbf16>,
    %340 = arith.truncf %311 : vector<16x256xf32> to vector<16x256xbf16>
    %c64_120 = arith.constant 64 : index
    %c256_121 = arith.constant 256 : index
    %341 = vector.load %arg11[%c64_120, %c256_121] : memref<144x512xbf16, #tpu.memory_space<vmem>>, vector<16x256xbf16>
    tpu.vector_store %arg11[%c64_120, %c256_121], %340 {strides = array<i32>} : memref<144x512xbf16, #tpu.memory_space<vmem>>, vector<16x256xbf16>,
    %c255_i32_122 = arith.constant 255 : i32
    %342 = tpu.dynamic_rotate %311 by %c255_i32_122 dim 1 : vector<16x256xf32>, i32 -> vector<16x256xf32>
    %343 = vector.extract_strided_slice %0 {offsets = [5, 0, 0], sizes = [1, 1, 256], strides = [1, 1, 1]} : vector<9x1x256xf32> to vector<1x1x256xf32>
    %344 = vector.shape_cast %343 : vector<1x1x256xf32> to vector<1x256xf32>
    %345 = vector.broadcast %344 : vector<1x256xf32> to vector<16x256xf32>
    %346 = arith.mulf %342, %345 : vector<16x256xf32>
    %347 = arith.truncf %346 : vector<16x256xf32> to vector<16x256xbf16>
    %c80_123 = arith.constant 80 : index
    %c256_124 = arith.constant 256 : index
    %348 = vector.load %arg11[%c80_123, %c256_124] : memref<144x512xbf16, #tpu.memory_space<vmem>>, vector<16x256xbf16>
    tpu.vector_store %arg11[%c80_123, %c256_124], %347 {strides = array<i32>} : memref<144x512xbf16, #tpu.memory_space<vmem>>, vector<16x256xbf16>,
    %c241_i32_125 = arith.constant 241 : i32
    %349 = tpu.dynamic_rotate %311 by %c241_i32_125 dim 1 : vector<16x256xf32>, i32 -> vector<16x256xf32>
    %350 = vector.extract_strided_slice %0 {offsets = [6, 0, 0], sizes = [1, 1, 256], strides = [1, 1, 1]} : vector<9x1x256xf32> to vector<1x1x256xf32>
    %351 = vector.shape_cast %350 : vector<1x1x256xf32> to vector<1x256xf32>
    %352 = vector.broadcast %351 : vector<1x256xf32> to vector<16x256xf32>
    %353 = arith.mulf %349, %352 : vector<16x256xf32>
    %354 = arith.truncf %353 : vector<16x256xf32> to vector<16x256xbf16>
    %c96_126 = arith.constant 96 : index
    %c256_127 = arith.constant 256 : index
    %355 = vector.load %arg11[%c96_126, %c256_127] : memref<144x512xbf16, #tpu.memory_space<vmem>>, vector<16x256xbf16>
    tpu.vector_store %arg11[%c96_126, %c256_127], %354 {strides = array<i32>} : memref<144x512xbf16, #tpu.memory_space<vmem>>, vector<16x256xbf16>,
    %c240_i32_128 = arith.constant 240 : i32
    %356 = tpu.dynamic_rotate %311 by %c240_i32_128 dim 1 : vector<16x256xf32>, i32 -> vector<16x256xf32>
    %357 = vector.extract_strided_slice %0 {offsets = [7, 0, 0], sizes = [1, 1, 256], strides = [1, 1, 1]} : vector<9x1x256xf32> to vector<1x1x256xf32>
    %358 = vector.shape_cast %357 : vector<1x1x256xf32> to vector<1x256xf32>
    %359 = vector.broadcast %358 : vector<1x256xf32> to vector<16x256xf32>
    %360 = arith.mulf %356, %359 : vector<16x256xf32>
    %361 = arith.truncf %360 : vector<16x256xf32> to vector<16x256xbf16>
    %c112_129 = arith.constant 112 : index
    %c256_130 = arith.constant 256 : index
    %362 = vector.load %arg11[%c112_129, %c256_130] : memref<144x512xbf16, #tpu.memory_space<vmem>>, vector<16x256xbf16>
    tpu.vector_store %arg11[%c112_129, %c256_130], %361 {strides = array<i32>} : memref<144x512xbf16, #tpu.memory_space<vmem>>, vector<16x256xbf16>,
    %c239_i32_131 = arith.constant 239 : i32
    %363 = tpu.dynamic_rotate %311 by %c239_i32_131 dim 1 : vector<16x256xf32>, i32 -> vector<16x256xf32>
    %364 = vector.extract_strided_slice %0 {offsets = [8, 0, 0], sizes = [1, 1, 256], strides = [1, 1, 1]} : vector<9x1x256xf32> to vector<1x1x256xf32>
    %365 = vector.shape_cast %364 : vector<1x1x256xf32> to vector<1x256xf32>
    %366 = vector.broadcast %365 : vector<1x256xf32> to vector<16x256xf32>
    %367 = arith.mulf %363, %366 : vector<16x256xf32>
    %368 = arith.truncf %367 : vector<16x256xf32> to vector<16x256xbf16>
    %c128_132 = arith.constant 128 : index
    %c256_133 = arith.constant 256 : index
    %369 = vector.load %arg11[%c128_132, %c256_133] : memref<144x512xbf16, #tpu.memory_space<vmem>>, vector<16x256xbf16>
    tpu.vector_store %arg11[%c128_132, %c256_133], %368 {strides = array<i32>} : memref<144x512xbf16, #tpu.memory_space<vmem>>, vector<16x256xbf16>,
    %c0_134 = arith.constant 0 : index
    %c0_135 = arith.constant 0 : index
    %370 = vector.load %arg8[%c0_134, %c0_135] : memref<16x144xbf16, #tpu.memory_space<vmem>>, vector<16x144xbf16>
    %c0_136 = arith.constant 0 : index
    %c0_137 = arith.constant 0 : index
    %371 = vector.load %arg11[%c0_136, %c0_137] : memref<144x512xbf16, #tpu.memory_space<vmem>>, vector<144x512xbf16>
    %cst_138 = arith.constant dense<0.000000e+00> : vector<16x512xf32>
    %372 = tpu.matmul %370, %371, %cst_138 {dimension_numbers = #tpu.dot_dimension_numbers<[1], [0], [0], [1], [0, 0, 1, 1], [], []>} : vector<16x144xbf16>, vector<144x512xbf16>, vector<16x512xf32> -> vector<16x512xf32>
    %c0_139 = arith.constant 0 : index
    %c0_140 = arith.constant 0 : index
    %373 = vector.load %arg9[%c0_139, %c0_140] : memref<16x16xbf16, #tpu.memory_space<vmem>>, vector<16x16xbf16>
    %c0_141 = arith.constant 0 : index
    %c0_142 = arith.constant 0 : index
    %c0_143 = arith.constant 0 : index
    %374 = vector.load %arg2[%c0_141, %c0_142, %c0_143] : memref<2x16x256xf32, #tpu.memory_space<vmem>>, vector<1x16x256xf32>
    %375 = vector.shape_cast %374 : vector<1x16x256xf32> to vector<16x256xf32>
    %376 = arith.truncf %375 : vector<16x256xf32> to vector<16x256xbf16>
    %cst_144 = arith.constant dense<0.000000e+00> : vector<16x256xf32>
    %377 = tpu.matmul %373, %376, %cst_144 {dimension_numbers = #tpu.dot_dimension_numbers<[1], [0], [0], [1], [0, 0, 1, 1], [], []>} : vector<16x16xbf16>, vector<16x256xbf16>, vector<16x256xf32> -> vector<16x256xf32>
    %378 = vector.extract_strided_slice %372 {offsets = [0, 0], sizes = [16, 256], strides = [1, 1]} : vector<16x512xf32> to vector<16x256xf32>
    %379 = arith.addf %377, %378 : vector<16x256xf32>
    %c0_145 = arith.constant 0 : index
    %c0_146 = arith.constant 0 : index
    %c0_147 = arith.constant 0 : index
    %380 = vector.load %arg10[%c0_145, %c0_146, %c0_147] : memref<2x16x256xf32, #tpu.memory_space<vmem>>, vector<1x16x256xf32>
    %381 = vector.shape_cast %380 : vector<1x16x256xf32> to vector<16x256xf32>
    %382 = vector.shape_cast %379 : vector<16x256xf32> to vector<1x16x256xf32>
    tpu.vector_store %arg10[%c0_145, %c0_146, %c0_147], %382 {strides = array<i32>} : memref<2x16x256xf32, #tpu.memory_space<vmem>>, vector<1x16x256xf32>,
    %c0_148 = arith.constant 0 : index
    %c0_149 = arith.constant 0 : index
    %383 = vector.load %arg9[%c0_148, %c0_149] : memref<16x16xbf16, #tpu.memory_space<vmem>>, vector<16x16xbf16>
    %c1_150 = arith.constant 1 : index
    %c0_151 = arith.constant 0 : index
    %c0_152 = arith.constant 0 : index
    %384 = vector.load %arg2[%c1_150, %c0_151, %c0_152] : memref<2x16x256xf32, #tpu.memory_space<vmem>>, vector<1x16x256xf32>
    %385 = vector.shape_cast %384 : vector<1x16x256xf32> to vector<16x256xf32>
    %386 = arith.truncf %385 : vector<16x256xf32> to vector<16x256xbf16>
    %cst_153 = arith.constant dense<0.000000e+00> : vector<16x256xf32>
    %387 = tpu.matmul %383, %386, %cst_153 {dimension_numbers = #tpu.dot_dimension_numbers<[1], [0], [0], [1], [0, 0, 1, 1], [], []>} : vector<16x16xbf16>, vector<16x256xbf16>, vector<16x256xf32> -> vector<16x256xf32>
    %388 = vector.extract_strided_slice %372 {offsets = [0, 256], sizes = [16, 256], strides = [1, 1]} : vector<16x512xf32> to vector<16x256xf32>
    %389 = arith.addf %387, %388 : vector<16x256xf32>
    %c1_154 = arith.constant 1 : index
    %c0_155 = arith.constant 0 : index
    %c0_156 = arith.constant 0 : index
    %390 = vector.load %arg10[%c1_154, %c0_155, %c0_156] : memref<2x16x256xf32, #tpu.memory_space<vmem>>, vector<1x16x256xf32>
    %391 = vector.shape_cast %390 : vector<1x16x256xf32> to vector<16x256xf32>
    %392 = vector.shape_cast %389 : vector<16x256xf32> to vector<1x16x256xf32>
    tpu.vector_store %arg10[%c1_154, %c0_155, %c0_156], %392 {strides = array<i32>} : memref<2x16x256xf32, #tpu.memory_space<vmem>>, vector<1x16x256xf32>,
    return
  }
  func.func @transform_0(%arg0: i32) -> (i32, i32, i32) {
    %c0_i32 = arith.constant 0 : i32
    %c0_i32_0 = arith.constant 0 : i32
    %c0_i32_1 = arith.constant 0 : i32
    %c0_i32_2 = arith.constant 0 : i32
    return %c0_i32, %c0_i32_0, %c0_i32_1 : i32, i32, i32
  }
  func.func @transform_1(%arg0: i32) -> (i32, i32, i32) {
    %c0_i32 = arith.constant 0 : i32
    %c0_i32_0 = arith.constant 0 : i32
    %c0_i32_1 = arith.constant 0 : i32
    return %arg0, %c0_i32, %c0_i32_0 : i32, i32, i32
  }
  func.func @transform_2(%arg0: i32) -> (i32, i32) {
    %c0_i32 = arith.constant 0 : i32
    %c0_i32_0 = arith.constant 0 : i32
    %c0_i32_1 = arith.constant 0 : i32
    return %c0_i32, %c0_i32_0 : i32, i32
  }
  func.func @transform_3(%arg0: i32) -> (i32, i32) {
    %c0_i32 = arith.constant 0 : i32
    %c0_i32_0 = arith.constant 0 : i32
    %c0_i32_1 = arith.constant 0 : i32
    return %c0_i32, %c0_i32_0 : i32, i32
  }
  func.func @transform_4(%arg0: i32) -> (i32, i32) {
    %c0_i32 = arith.constant 0 : i32
    %c0_i32_0 = arith.constant 0 : i32
    %c0_i32_1 = arith.constant 0 : i32
    return %c0_i32, %c0_i32_0 : i32, i32
  }
  func.func @transform_5(%arg0: i32) -> (i32, i32) {
    %c0_i32 = arith.constant 0 : i32
    %c0_i32_0 = arith.constant 0 : i32
    %c0_i32_1 = arith.constant 0 : i32
    return %c0_i32, %c0_i32_0 : i32, i32
  }
  func.func @transform_6(%arg0: i32) -> (i32, i32) {
    %c0_i32 = arith.constant 0 : i32
    %c0_i32_0 = arith.constant 0 : i32
    %c0_i32_1 = arith.constant 0 : i32
    return %c0_i32, %c0_i32_0 : i32, i32
  }
  func.func @transform_7(%arg0: i32) -> (i32, i32) {
    %c0_i32 = arith.constant 0 : i32
    %c0_i32_0 = arith.constant 0 : i32
    %c0_i32_1 = arith.constant 0 : i32
    return %c0_i32, %c0_i32_0 : i32, i32
  }
  func.func @transform_8(%arg0: i32) -> (i32, i32) {
    %c0_i32 = arith.constant 0 : i32
    %c0_i32_0 = arith.constant 0 : i32
    %c0_i32_1 = arith.constant 0 : i32
    return %c0_i32, %c0_i32_0 : i32, i32
  }
  func.func @transform_9(%arg0: i32) -> (i32, i32, i32) {
    %c0_i32 = arith.constant 0 : i32
    %c0_i32_0 = arith.constant 0 : i32
    %c0_i32_1 = arith.constant 0 : i32
    return %arg0, %c0_i32, %c0_i32_0 : i32, i32, i32
  }
}

</mosaic_0001>

<llo_original>
// kernel: tpu_custom_call.1
$region0: #{tpu_custom_call.1}
  #allocation0 [shape = 'u32[]', space=smem, size = 0x4, offset = 0x4, fixed_abs, tag = 'smem constant byte address 0x4 - core index']
  #allocation1 [shape = 'u32[144,128]{1,0:T(1,128)}', space=vmem, size = 0x12000, scoped, tag = 'internal scratch']
  #allocation2 [shape = 'bf16[144,512]{1,0:T(16,128)(2,1)}', space=vmem, size = 0x24000, scoped, tag = 'scratch operand']
  %s0 = inlined_call_operand.vmem [shape: f32[9,1,256], index: 0, kind: input, shape index: {}]
  %s1 = inlined_call_operand.hbm [shape: f32[4,16,256], index: 1, kind: input, shape index: {}]
  %s2 = inlined_call_operand.vmem [shape: f32[16,1], index: 2, kind: input, shape index: {}]
  %s3 = inlined_call_operand.vmem [shape: f32[16,1], index: 3, kind: input, shape index: {}]
  %s4 = inlined_call_operand.vmem [shape: bf16[16,144], index: 4, kind: input, shape index: {}]
  %s5 = inlined_call_operand.vmem [shape: f32[16,1], index: 5, kind: input, shape index: {}]
  %s6 = inlined_call_operand.vmem [shape: f32[16,1], index: 6, kind: input, shape index: {}]
  %s7 = inlined_call_operand.vmem [shape: bf16[16,144], index: 7, kind: input, shape index: {}]
  %s8 = inlined_call_operand.vmem [shape: bf16[16,16], index: 8, kind: input, shape index: {}]
  %s9 = inlined_call_operand.hbm [shape: f32[4,16,256], index: 9, kind: output, shape index: {}]
  %s10 = sld [smem:[#allocation0]]
  $region73: #{tpu_custom_call.1} parent=0
    _
  %s12 = ssub.s32 1, %s10
  %s13 = scalar_select 0, %s12, %s10
  $region1: #{tpu_custom_call.1} parent=0
    #allocation3 [shape = 'u8[65536]{0}', space=vmem, size = 0x10000, scoped, tag = 'input window, operand 1']
    #allocation4 [shape = 's32[2]{0}', space=sflag, size = 0x8, scoped, tag = 'scoped memory for tpu_custom_call.1']
    #allocation5 [shape = 's32[2]{0}', space=sflag, size = 0x8, scoped, tag = 'scoped memory for tpu_custom_call.1']
    #allocation6 [shape = 'u8[65536]{0}', space=vmem, size = 0x10000, scoped, tag = 'output window, operand 0']
    %14 = vsyncpa [#allocation4], 0
    %s15 = scalar_lea.sflag [#allocation4], 1
    %16 = vsyncpa %s15, 0
    %17 = vsyncpa [#allocation5], 0
    %s18 = scalar_lea.sflag [#allocation5], 1
    %19 = vsyncpa %s18, 0
    loop: start=0, step=1, limit=4
    $region2: #{tpu_custom_call.1} parent=1 // loop_pre_header
      _
    $region3: #{tpu_custom_call.1} parent=1 // loop_header
      %s21 = sphi 0, %s25
      %p22 = scmp.ge.s32.totalorder %s21, 4
      %s29 = sphi 0, %s29
      %s31 = sphi 0, %s29
      %s32 = sphi 0, %s31
      %s46 = sphi 0, %s32
      %s52 = sphi 0, %s54
      %s55 = sphi 0, %s52
      %s56 = sphi 0, %s55
      %s72 = sphi 0, %s56
      %s76 = sphi 0, %s76
      %s78 = sphi 0, %s76
      %s79 = sphi 0, %s78
      %s93 = sphi 0, %s79
      %s97 = sphi 0, %s97
      %s99 = sphi 0, %s97
      %s100 = sphi 0, %s99
      %s114 = sphi 0, %s100
      %s118 = sphi 0, %s118
      %s120 = sphi 0, %s118
      %s121 = sphi 0, %s120
      %s135 = sphi 0, %s121
      %s139 = sphi 0, %s139
      %s141 = sphi 0, %s139
      %s142 = sphi 0, %s141
      %s156 = sphi 0, %s142
      %s160 = sphi 0, %s160
      %s162 = sphi 0, %s160
      %s163 = sphi 0, %s162
      %s177 = sphi 0, %s163
      %s181 = sphi 0, %s181
      %s183 = sphi 0, %s181
      %s184 = sphi 0, %s183
      %s198 = sphi 0, %s184
      %s202 = sphi 0, %s202
      %s204 = sphi 0, %s202
      %s205 = sphi 0, %s204
      %s219 = sphi 0, %s205
      %s225 = sphi 0, %s227
      %s228 = sphi 0, %s225
      %s229 = sphi 0, %s228
      %s245 = sphi 0, %s229
    $region4: #{tpu_custom_call.1} parent=1 // loop_header_branch
      %24 = sbr.rel (%p22) target = $region8
    $region5: #{tpu_custom_call.1} parent=1 // loop_body
      %s26 = ssub.s32 %s21, 1
      %s27 = ssub.s32 %s21, 2
      %s28 = sadd.s32 %s21, 1
      %s30 = sadd.s32 %s29, 1
      %p33 = scmp.eq.s32.totalorder %s21, 1
      %p34 = scmp.ne.s32.totalorder %s29, %s31
      %p35 = scmp.eq.s32.totalorder %s21, 0
      %p36 = por %p34, %p35
      %p37 = scmp.ne.s32.totalorder %s29, %s31
      %p38 = scmp.eq.s32.totalorder %s26, 1
      %p39 = por %p37, %p38
      %p40 = scmp.ne.s32.totalorder %s31, %s32
      %p41 = scmp.eq.s32.totalorder %s26, 0
      %p42 = por %p40, %p41
      %p43 = scmp.ne.s32.totalorder %s31, %s32
      %p44 = scmp.eq.s32.totalorder %s27, 1
      %p45 = por %p43, %p44
      %p47 = scmp.ne.s32.totalorder %s32, %s46
      %p48 = scmp.eq.s32.totalorder %s27, 0
      %p49 = por %p47, %p48
      %s50 = ssub.s32 %s21, %s28
      %p51 = scmp.eq.s32.totalorder %s50, 0
      %s53 = sadd.s32 %s52, 1
      %s54 = scalar_select %p51, %s52, %s53
      %p57 = pneg %p51
      %p58 = scmp.eq.s32.totalorder %s21, 1
      %p59 = por %p57, %p58
      %p60 = scmp.ne.s32.totalorder %s52, %s55
      %p61 = scmp.eq.s32.totalorder %s21, 0
      %p62 = por %p60, %p61
      %p63 = scmp.ne.s32.totalorder %s52, %s55
      %p64 = scmp.eq.s32.totalorder %s26, 1
      %p65 = por %p63, %p64
      %p66 = scmp.ne.s32.totalorder %s55, %s56
      %p67 = scmp.eq.s32.totalorder %s26, 0
      %p68 = por %p66, %p67
      %p69 = scmp.ne.s32.totalorder %s55, %s56
      %p70 = scmp.eq.s32.totalorder %s27, 1
      %p71 = por %p69, %p70
      %p73 = scmp.ne.s32.totalorder %s56, %s72
      %p74 = scmp.eq.s32.totalorder %s27, 0
      %p75 = por %p73, %p74
      %s77 = sadd.s32 %s76, 1
      %p80 = scmp.eq.s32.totalorder %s21, 1
      %p81 = scmp.ne.s32.totalorder %s76, %s78
      %p82 = scmp.eq.s32.totalorder %s21, 0
      %p83 = por %p81, %p82
      %p84 = scmp.ne.s32.totalorder %s76, %s78
      %p85 = scmp.eq.s32.totalorder %s26, 1
      %p86 = por %p84, %p85
      %p87 = scmp.ne.s32.totalorder %s78, %s79
      %p88 = scmp.eq.s32.totalorder %s26, 0
      %p89 = por %p87, %p88
      %p90 = scmp.ne.s32.totalorder %s78, %s79
      %p91 = scmp.eq.s32.totalorder %s27, 1
      %p92 = por %p90, %p91
      %p94 = scmp.ne.s32.totalorder %s79, %s93
      %p95 = scmp.eq.s32.totalorder %s27, 0
      %p96 = por %p94, %p95
      %s98 = sadd.s32 %s97, 1
      %p101 = scmp.eq.s32.totalorder %s21, 1
      %p102 = scmp.ne.s32.totalorder %s97, %s99
      %p103 = scmp.eq.s32.totalorder %s21, 0
      %p104 = por %p102, %p103
      %p105 = scmp.ne.s32.totalorder %s97, %s99
      %p106 = scmp.eq.s32.totalorder %s26, 1
      %p107 = por %p105, %p106
      %p108 = scmp.ne.s32.totalorder %s99, %s100
      %p109 = scmp.eq.s32.totalorder %s26, 0
      %p110 = por %p108, %p109
      %p111 = scmp.ne.s32.totalorder %s99, %s100
      %p112 = scmp.eq.s32.totalorder %s27, 1
      %p113 = por %p111, %p112
      %p115 = scmp.ne.s32.totalorder %s100, %s114
      %p116 = scmp.eq.s32.totalorder %s27, 0
      %p117 = por %p115, %p116
      %s119 = sadd.s32 %s118, 1
      %p122 = scmp.eq.s32.totalorder %s21, 1
      %p123 = scmp.ne.s32.totalorder %s118, %s120
      %p124 = scmp.eq.s32.totalorder %s21, 0
      %p125 = por %p123, %p124
      %p126 = scmp.ne.s32.totalorder %s118, %s120
      %p127 = scmp.eq.s32.totalorder %s26, 1
      %p128 = por %p126, %p127
      %p129 = scmp.ne.s32.totalorder %s120, %s121
      %p130 = scmp.eq.s32.totalorder %s26, 0
      %p131 = por %p129, %p130
      %p132 = scmp.ne.s32.totalorder %s120, %s121
      %p133 = scmp.eq.s32.totalorder %s27, 1
      %p134 = por %p132, %p133
      %p136 = scmp.ne.s32.totalorder %s121, %s135
      %p137 = scmp.eq.s32.totalorder %s27, 0
      %p138 = por %p136, %p137
      %s140 = sadd.s32 %s139, 1
      %p143 = scmp.eq.s32.totalorder %s21, 1
      %p144 = scmp.ne.s32.totalorder %s139, %s141
      %p145 = scmp.eq.s32.totalorder %s21, 0
      %p146 = por %p144, %p145
      %p147 = scmp.ne.s32.totalorder %s139, %s141
      %p148 = scmp.eq.s32.totalorder %s26, 1
      %p149 = por %p147, %p148
      %p150 = scmp.ne.s32.totalorder %s141, %s142
      %p151 = scmp.eq.s32.totalorder %s26, 0
      %p152 = por %p150, %p151
      %p153 = scmp.ne.s32.totalorder %s141, %s142
      %p154 = scmp.eq.s32.totalorder %s27, 1
      %p155 = por %p153, %p154
      %p157 = scmp.ne.s32.totalorder %s142, %s156
      %p158 = scmp.eq.s32.totalorder %s27, 0
      %p159 = por %p157, %p158
      %s161 = sadd.s32 %s160, 1
      %p164 = scmp.eq.s32.totalorder %s21, 1
      %p165 = scmp.ne.s32.totalorder %s160, %s162
      %p166 = scmp.eq.s32.totalorder %s21, 0
      %p167 = por %p165, %p166
      %p168 = scmp.ne.s32.totalorder %s160, %s162
      %p169 = scmp.eq.s32.totalorder %s26, 1
      %p170 = por %p168, %p169
      %p171 = scmp.ne.s32.totalorder %s162, %s163
      %p172 = scmp.eq.s32.totalorder %s26, 0
      %p173 = por %p171, %p172
      %p174 = scmp.ne.s32.totalorder %s162, %s163
      %p175 = scmp.eq.s32.totalorder %s27, 1
      %p176 = por %p174, %p175
      %p178 = scmp.ne.s32.totalorder %s163, %s177
      %p179 = scmp.eq.s32.totalorder %s27, 0
      %p180 = por %p178, %p179
      %s182 = sadd.s32 %s181, 1
      %p185 = scmp.eq.s32.totalorder %s21, 1
      %p186 = scmp.ne.s32.totalorder %s181, %s183
      %p187 = scmp.eq.s32.totalorder %s21, 0
      %p188 = por %p186, %p187
      %p189 = scmp.ne.s32.totalorder %s181, %s183
      %p190 = scmp.eq.s32.totalorder %s26, 1
      %p191 = por %p189, %p190
      %p192 = scmp.ne.s32.totalorder %s183, %s184
      %p193 = scmp.eq.s32.totalorder %s26, 0
      %p194 = por %p192, %p193
      %p195 = scmp.ne.s32.totalorder %s183, %s184
      %p196 = scmp.eq.s32.totalorder %s27, 1
      %p197 = por %p195, %p196
      %p199 = scmp.ne.s32.totalorder %s184, %s198
      %p200 = scmp.eq.s32.totalorder %s27, 0
      %p201 = por %p199, %p200
      %s203 = sadd.s32 %s202, 1
      %p206 = scmp.eq.s32.totalorder %s21, 1
      %p207 = scmp.ne.s32.totalorder %s202, %s204
      %p208 = scmp.eq.s32.totalorder %s21, 0
      %p209 = por %p207, %p208
      %p210 = scmp.ne.s32.totalorder %s202, %s204
      %p211 = scmp.eq.s32.totalorder %s26, 1
      %p212 = por %p210, %p211
      %p213 = scmp.ne.s32.totalorder %s204, %s205
      %p214 = scmp.eq.s32.totalorder %s26, 0
      %p215 = por %p213, %p214
      %p216 = scmp.ne.s32.totalorder %s204, %s205
      %p217 = scmp.eq.s32.totalorder %s27, 1
      %p218 = por %p216, %p217
      %p220 = scmp.ne.s32.totalorder %s205, %s219
      %p221 = scmp.eq.s32.totalorder %s27, 0
      %p222 = por %p220, %p221
      %s223 = ssub.s32 %s21, %s28
      %p224 = scmp.eq.s32.totalorder %s223, 0
      %s226 = sadd.s32 %s225, 1
      %s227 = scalar_select %p224, %s225, %s226
      %p230 = pneg %p224
      %p231 = scmp.eq.s32.totalorder %s21, 1
      %p232 = por %p230, %p231
      %p233 = scmp.ne.s32.totalorder %s225, %s228
      %p234 = scmp.eq.s32.totalorder %s21, 0
      %p235 = por %p233, %p234
      %p236 = scmp.ne.s32.totalorder %s225, %s228
      %p237 = scmp.eq.s32.totalorder %s26, 1
      %p238 = por %p236, %p237
      %p239 = scmp.ne.s32.totalorder %s228, %s229
      %p240 = scmp.eq.s32.totalorder %s26, 0
      %p241 = por %p239, %p240
      %p242 = scmp.ne.s32.totalorder %s228, %s229
      %p243 = scmp.eq.s32.totalorder %s27, 1
      %p244 = por %p242, %p243
      %p246 = scmp.ne.s32.totalorder %s229, %s245
      %p247 = scmp.eq.s32.totalorder %s27, 0
      %p248 = por %p246, %p247
      %p249 = scmp.le.s32.totalorder 1, %s21
      %p250 = scmp.lt.s32.totalorder %s21, 3
      %p251 = pnand %p249, %p250
      %p252 = pneg %p251
      // Predicated region
      $region9: #{tpu_custom_call.1} parent=5 // pred_check
        _
      $region10: #{tpu_custom_call.1} parent=5 // pred_check_branch
        %254 = sbr.rel (%p251) target = $region12
      $region11: #{tpu_custom_call.1} parent=5 // pred_region
        %s255 = ssub.s32 %s21, 1
        // Predicated region
        $region13: #{tpu_custom_call.1} parent=11 // pred_check
          %p256 = pneg %p42
        $region14: #{tpu_custom_call.1} parent=11 // pred_check_branch
          %258 = sbr.rel (%p256) target = $region16
        $region15: #{tpu_custom_call.1} parent=11 // pred_region
          _
        $region16: #{tpu_custom_call.1} parent=11 // pred_fallthru
          _
        // Predicated region
        $region17: #{tpu_custom_call.1} parent=11 // pred_check
          %p259 = pneg %p89
        $region18: #{tpu_custom_call.1} parent=11 // pred_check_branch
          %261 = sbr.rel (%p259) target = $region20
        $region19: #{tpu_custom_call.1} parent=11 // pred_region
          _
        $region20: #{tpu_custom_call.1} parent=11 // pred_fallthru
          _
        // Predicated region
        $region21: #{tpu_custom_call.1} parent=11 // pred_check
          %p262 = pneg %p110
        $region22: #{tpu_custom_call.1} parent=11 // pred_check_branch
          %264 = sbr.rel (%p262) target = $region24
        $region23: #{tpu_custom_call.1} parent=11 // pred_region
          _
        $region24: #{tpu_custom_call.1} parent=11 // pred_fallthru
          _
        // Predicated region
        $region25: #{tpu_custom_call.1} parent=11 // pred_check
          %p265 = pneg %p131
        $region26: #{tpu_custom_call.1} parent=11 // pred_check_branch
          %267 = sbr.rel (%p265) target = $region28
        $region27: #{tpu_custom_call.1} parent=11 // pred_region
          _
        $region28: #{tpu_custom_call.1} parent=11 // pred_fallthru
          _
        // Predicated region
        $region29: #{tpu_custom_call.1} parent=11 // pred_check
          %p268 = pneg %p152
        $region30: #{tpu_custom_call.1} parent=11 // pred_check_branch
          %270 = sbr.rel (%p268) target = $region32
        $region31: #{tpu_custom_call.1} parent=11 // pred_region
          _
        $region32: #{tpu_custom_call.1} parent=11 // pred_fallthru
          _
        // Predicated region
        $region33: #{tpu_custom_call.1} parent=11 // pred_check
          %p271 = pneg %p173
        $region34: #{tpu_custom_call.1} parent=11 // pred_check_branch
          %273 = sbr.rel (%p271) target = $region36
        $region35: #{tpu_custom_call.1} parent=11 // pred_region
          _
        $region36: #{tpu_custom_call.1} parent=11 // pred_fallthru
          _
        // Predicated region
        $region37: #{tpu_custom_call.1} parent=11 // pred_check
          %p274 = pneg %p194
        $region38: #{tpu_custom_call.1} parent=11 // pred_check_branch
          %276 = sbr.rel (%p274) target = $region40
        $region39: #{tpu_custom_call.1} parent=11 // pred_region
          _
        $region40: #{tpu_custom_call.1} parent=11 // pred_fallthru
          _
        // Predicated region
        $region41: #{tpu_custom_call.1} parent=11 // pred_check
          %p277 = pneg %p215
        $region42: #{tpu_custom_call.1} parent=11 // pred_check_branch
          %279 = sbr.rel (%p277) target = $region44
        $region43: #{tpu_custom_call.1} parent=11 // pred_region
          _
        $region44: #{tpu_custom_call.1} parent=11 // pred_fallthru
          _
      $region12: #{tpu_custom_call.1} parent=5 // pred_fallthru
        _
      %p280 = scmp.lt.s32.totalorder %s21, 2
      // Predicated region
      $region45: #{tpu_custom_call.1} parent=5 // pred_check
        %p281 = pneg %p280
      $region46: #{tpu_custom_call.1} parent=5 // pred_check_branch
        %283 = sbr.rel (%p281) target = $region48
      $region47: #{tpu_custom_call.1} parent=5 // pred_region
        // Predicated region
        $region49: #{tpu_custom_call.1} parent=47 // pred_check
          %p284 = pneg %p62
        $region50: #{tpu_custom_call.1} parent=47 // pred_check_branch
          %286 = sbr.rel (%p284) target = $region52
        $region51: #{tpu_custom_call.1} parent=47 // pred_region
          %s287 = sand.u32 %s52, 1
          %s288 = scalar_lea.sflag [#allocation4], %s287
          %s289 = sand.u32 %s52, 1
          %s290 = smul.addr %s289, 64
          %s291 = scalar_lea.vmem [#allocation3], %s290
          %s292 = smul.u32 2, %s21
          %s294 = ssub.s32 1024, 1024
          %295 = vsyncadd %s288, %s294
          %s296 = smul.addr %s292, 4
          %s297 = smul.addr %s296, 128
          %s298 = scalar_lea.hbm %s1, %s297
          %s299 = sshll.u32 %s291, 4
          %s300 = int_to_ptr.vmem [resolvable:$true] %s299
          %305 = dma.hbm_to_vmem [thread:$0]  %s298, 1024, %s300, %s288, 256, 256, 16
        $region52: #{tpu_custom_call.1} parent=47 // pred_fallthru
          _
      $region48: #{tpu_custom_call.1} parent=5 // pred_fallthru
        _
      %p306 = scmp.le.s32.totalorder 1, %s21
      %p307 = scmp.lt.s32.totalorder %s21, 3
      %p308 = pnand %p306, %p307
      %p309 = pneg %p308
      // Predicated region
      $region53: #{tpu_custom_call.1} parent=5 // pred_check
        _
      $region54: #{tpu_custom_call.1} parent=5 // pred_check_branch
        %311 = sbr.rel (%p308) target = $region56
      $region55: #{tpu_custom_call.1} parent=5 // pred_region
        %s312 = ssub.s32 %s21, 1
        %s313 = sand.u32 %s55, 1
        %s314 = scalar_lea.sflag [#allocation4], %s313
        %s315 = sand.u32 %s55, 1
        %s316 = smul.addr %s315, 64
        %s317 = scalar_lea.vmem [#allocation3], %s316
        // Predicated region
        $region57: #{tpu_custom_call.1} parent=55 // pred_check
          %p318 = pneg %p68
        $region58: #{tpu_custom_call.1} parent=55 // pred_check_branch
          %320 = sbr.rel (%p318) target = $region60
        $region59: #{tpu_custom_call.1} parent=55 // pred_region
          %321 = dma.done %s314, 1024
        $region60: #{tpu_custom_call.1} parent=55 // pred_fallthru
          _
        %p322 = pneg %p42
        %p323 = pneg %p39
        %s324 = sand.u32 %s55, 1
        %s325 = scalar_lea.sflag [#allocation4], %s324
        %s326 = sand.u32 %s55, 1
        %s327 = smul.addr %s326, 64
        %s328 = scalar_lea.vmem [#allocation3], %s327
        %p329 = pneg %p68
        %p330 = pneg %p65
        %p331 = pneg %p89
        %p332 = pneg %p86
        %p333 = pneg %p110
        %p334 = pneg %p107
        %p335 = pneg %p131
        %p336 = pneg %p128
        %p337 = pneg %p152
        %p338 = pneg %p149
        %p339 = pneg %p173
        %p340 = pneg %p170
        %p341 = pneg %p194
        %p342 = pneg %p191
        %p343 = pneg %p215
        %p344 = pneg %p212
        %p345 = pneg %p241
        %p346 = pneg %p238
        %s347 = sand.u32 %s228, 1
        %s348 = scalar_lea.sflag [#allocation5], %s347
        %s349 = sand.u32 %s228, 1
        %s350 = smul.addr %s349, 64
        %s351 = scalar_lea.vmem [#allocation6], %s350
        %s352 = smul.u32 2, %s26
        %s353 = smul.u32 2, %s26
        %v355 = vld [vmem:[%s0] sm:$0x3]
        %v356 = vld [vmem:[%s0 + $0x2] sm:$0x3]
        %v357 = vld [vmem:[%s0 + $0x4] sm:$0x3]
        %v358 = vld [vmem:[%s0 + $0x6] sm:$0x3]
        %v359 = vld [vmem:[%s0 + $0xa] sm:$0x3]
        %v360 = vld [vmem:[%s0 + $0xc] sm:$0x3]
        %v361 = vld [vmem:[%s0 + $0xe] sm:$0x3]
        %v362 = vld [vmem:[%s0 + $0x10] sm:$0x3]
        %v363 = vld [vmem:[%s2] sm:$0xff]
        %v364 = vld [vmem:[%s2 + $0x8] sm:$0xff]
        %v365 = vld [vmem:[%s3] sm:$0xff]
        %v366 = vld [vmem:[%s3 + $0x8] sm:$0xff]
        %v367 = vld [vmem:[%s317] sm:$0xff]
        %v368 = vld [vmem:[%s317 + $0x8] sm:$0xff]
        %v369 = vld [vmem:[%s317 + $0x10] sm:$0xff]
        %v370 = vld [vmem:[%s317 + $0x18] sm:$0xff]
        %v371 = vmul.f32 %v367, %v367
        %v372 = vmul.f32 %v368, %v368
        %v373 = vmul.f32 %v369, %v369
        %v374 = vmul.f32 %v370, %v370
        %v375 = vadd.f32 %v367, %v368
        %376 = vadd.xlane.f32.xlu0 %v375
        %v377 = vpop.xlane.xlu0 %376
        %v378 = vadd.f32 %v369, %v370
        %379 = vadd.xlane.f32.xlu0 %v378
        %v380 = vpop.xlane.xlu0 %379
        %v381 = vadd.f32 %v371, %v372
        %382 = vadd.xlane.f32.xlu0 %v381
        %v383 = vpop.xlane.xlu0 %382
        %v384 = vadd.f32 %v373, %v374
        %385 = vadd.xlane.f32.xlu0 %v384
        %v386 = vpop.xlane.xlu0 %385
        %vm387 = vcmask 7168
        %v388 = vsel %vm387, %v377, 0.0
        %v389 = vsel %vm387, %v380, 0.0
        %v390 = vadd.f32 %v388, %v389
        %391 = vadd.xlane.f32.xlu0 %v390
        %v392 = vpop.xlane.xlu0 %391
        %v393 = vrot.slane %v392, 4
        %v394 = vadd.f32 %v392, %v393
        %v395 = vrot.slane %v394, 2
        %v396 = vadd.f32 %v394, %v395
        %v397 = vrot.slane %v396, 1
        %v398 = vadd.f32 %v396, %v397
        %s399 = vtos %v398
        %v400 = vsel %vm387, %v383, 0.0
        %v401 = vsel %vm387, %v386, 0.0
        %v402 = vadd.f32 %v400, %v401
        %403 = vadd.xlane.f32.xlu0 %v402
        %v404 = vpop.xlane.xlu0 %403
        %v405 = vrot.slane %v404, 4
        %v406 = vadd.f32 %v404, %v405
        %v407 = vrot.slane %v406, 2
        %v408 = vadd.f32 %v406, %v407
        %v409 = vrot.slane %v408, 1
        %v410 = vadd.f32 %v408, %v409
        %s411 = vtos %v410
        %s412 = smul.f32 %s399, 0.0009765625
        %s413 = smul.f32 %s411, 0.0009765625
        %s414 = smul.f32 %s412, %s412
        %s415 = ssub.f32 %s413, %s414
        %s416 = sadd.f32 %s415, 1e-05
        %v417 = vstv %s416
        %v418 = vrsqrt.pop %v417
        %s419 = vtos %v418
        %v420 = vstv %s419
        %v421 = vmul.f32 %v363, %v420
        %v422 = vmul.f32 %v364, %v420
        %v423 = vstv %s412
        %v424 = vmul.f32 %v423, %v421
        %v425 = vmul.f32 %v423, %v422
        %v426 = vsub.f32 %v365, %v424
        %v427 = vsub.f32 %v366, %v425
        %429 = vset.pattern.permute.xlu0 0
        %430 = vperm.xlu0 %429, %v421
        %v431 = vpop.permute.xlu0 %430
        %434 = vset.pattern.permute.xlu0 0
        %435 = vperm.xlu0 %434, %v422
        %v436 = vpop.permute.xlu0 %435
        %v438 = vmul.f32 %v367, %v431
        %v439 = vmul.f32 %v368, %v431
        %v440 = vmul.f32 %v369, %v436
        %v441 = vmul.f32 %v370, %v436
        %443 = vset.pattern.permute.xlu0 0
        %444 = vperm.xlu0 %443, %v426
        %v445 = vpop.permute.xlu0 %444
        %448 = vset.pattern.permute.xlu0 0
        %449 = vperm.xlu0 %448, %v427
        %v450 = vpop.permute.xlu0 %449
        %v452 = vadd.f32 %v438, %v445
        %v453 = vadd.f32 %v439, %v445
        %v454 = vadd.f32 %v440, %v450
        %v455 = vadd.f32 %v441, %v450
        %v456 = vmax.f32 %v452, 0.0
        %v457 = vmax.f32 %v453, 0.0
        %v458 = vmax.f32 %v454, 0.0
        %v459 = vmax.f32 %v455, 0.0
        %460 = vrot.lane.b32.xlu0 %v456, 17
        %v461 = vpop.permute.xlu0 %460
        %462 = vrot.lane.b32.xlu0 %v458, 17
        %v463 = vpop.permute.xlu0 %462
        %464 = vrot.lane.b32.xlu0 %v457, 17
        %v465 = vpop.permute.xlu0 %464
        %466 = vrot.lane.b32.xlu0 %v459, 17
        %v467 = vpop.permute.xlu0 %466
        %v468 = vlaneseq
        %v469 = vand.u32 %v468, 127
        %vm470 = vcmp.lt.s32.totalorder %v469, 17
        %v471 = vsel %vm470, %v461, %v465
        %v472 = vsel %vm470, %v463, %v467
        %v473 = vsel %vm470, %v465, %v461
        %v474 = vsel %vm470, %v467, %v463
        %v476 = vlaneseq
        %v477 = vshrl.u32 %v476, 7
        %v478 = vsub.s32 0, %v477
        %v479 = vrot.slane %v355, %v478
        %v480 = vlaneseq
        %v481 = vshrl.u32 %v480, 7
        %v482 = vsub.s32 1, %v481
        %v483 = vrot.slane %v355, %v482
        %v486 = vmul.f32 %v473, %v479
        %v487 = vmul.f32 %v471, %v483
        %v488 = vmul.f32 %v474, %v479
        %v489 = vmul.f32 %v472, %v483
        %v490 = vpack.c.bf16 %v488, %v486
        %v491 = vpack.c.bf16 %v489, %v487
        %492 = vst [vmem:[#allocation2] sm:$0xff] %v490
        %493 = vst [vmem:[#allocation2 + $0x8] sm:$0xff] %v491
        %494 = vrot.lane.b32.xlu0 %v456, 16
        %v495 = vpop.permute.xlu0 %494
        %496 = vrot.lane.b32.xlu0 %v458, 16
        %v497 = vpop.permute.xlu0 %496
        %498 = vrot.lane.b32.xlu0 %v457, 16
        %v499 = vpop.permute.xlu0 %498
        %500 = vrot.lane.b32.xlu0 %v459, 16
        %v501 = vpop.permute.xlu0 %500
        %vm502 = vcmp.lt.s32.totalorder %v469, 16
        %v503 = vsel %vm502, %v495, %v499
        %v504 = vsel %vm502, %v497, %v501
        %v505 = vsel %vm502, %v499, %v495
        %v506 = vsel %vm502, %v501, %v497
        %v508 = vlaneseq
        %v509 = vshrl.u32 %v508, 7
        %v510 = vsub.s32 0, %v509
        %v511 = vrot.slane %v356, %v510
        %v512 = vlaneseq
        %v513 = vshrl.u32 %v512, 7
        %v514 = vsub.s32 1, %v513
        %v515 = vrot.slane %v356, %v514
        %v518 = vmul.f32 %v505, %v511
        %v519 = vmul.f32 %v503, %v515
        %v520 = vmul.f32 %v506, %v511
        %v521 = vmul.f32 %v504, %v515
        %v522 = vpack.c.bf16 %v520, %v518
        %v523 = vpack.c.bf16 %v521, %v519
        %524 = vst [vmem:[#allocation2 + $0x20] sm:$0xff] %v522
        %525 = vst [vmem:[#allocation2 + $0x28] sm:$0xff] %v523
        %526 = vrot.lane.b32.xlu0 %v456, 15
        %v527 = vpop.permute.xlu0 %526
        %528 = vrot.lane.b32.xlu0 %v458, 15
        %v529 = vpop.permute.xlu0 %528
        %530 = vrot.lane.b32.xlu0 %v457, 15
        %v531 = vpop.permute.xlu0 %530
        %532 = vrot.lane.b32.xlu0 %v459, 15
        %v533 = vpop.permute.xlu0 %532
        %vm534 = vcmp.lt.s32.totalorder %v469, 15
        %v535 = vsel %vm534, %v527, %v531
        %v536 = vsel %vm534, %v529, %v533
        %v537 = vsel %vm534, %v531, %v527
        %v538 = vsel %vm534, %v533, %v529
        %v540 = vlaneseq
        %v541 = vshrl.u32 %v540, 7
        %v542 = vsub.s32 0, %v541
        %v543 = vrot.slane %v357, %v542
        %v544 = vlaneseq
        %v545 = vshrl.u32 %v544, 7
        %v546 = vsub.s32 1, %v545
        %v547 = vrot.slane %v357, %v546
        %v550 = vmul.f32 %v537, %v543
        %v551 = vmul.f32 %v535, %v547
        %v552 = vmul.f32 %v538, %v543
        %v553 = vmul.f32 %v536, %v547
        %v554 = vpack.c.bf16 %v552, %v550
        %v555 = vpack.c.bf16 %v553, %v551
        %556 = vst [vmem:[#allocation2 + $0x40] sm:$0xff] %v554
        %557 = vst [vmem:[#allocation2 + $0x48] sm:$0xff] %v555
        %558 = vrot.lane.b32.xlu0 %v456, 1
        %v559 = vpop.permute.xlu0 %558
        %560 = vrot.lane.b32.xlu0 %v458, 1
        %v561 = vpop.permute.xlu0 %560
        %562 = vrot.lane.b32.xlu0 %v457, 1
        %v563 = vpop.permute.xlu0 %562
        %564 = vrot.lane.b32.xlu0 %v459, 1
        %v565 = vpop.permute.xlu0 %564
        %vm566 = vcmp.lt.s32.totalorder %v469, 1
        %v567 = vsel %vm566, %v559, %v563
        %v568 = vsel %vm566, %v561, %v565
        %v569 = vsel %vm566, %v563, %v559
        %v570 = vsel %vm566, %v565, %v561
        %v572 = vlaneseq
        %v573 = vshrl.u32 %v572, 7
        %v574 = vsub.s32 0, %v573
        %v575 = vrot.slane %v358, %v574
        %v576 = vlaneseq
        %v577 = vshrl.u32 %v576, 7
        %v578 = vsub.s32 1, %v577
        %v579 = vrot.slane %v358, %v578
        %v582 = vmul.f32 %v569, %v575
        %v583 = vmul.f32 %v567, %v579
        %v584 = vmul.f32 %v570, %v575
        %v585 = vmul.f32 %v568, %v579
        %v586 = vpack.c.bf16 %v584, %v582
        %v587 = vpack.c.bf16 %v585, %v583
        %588 = vst [vmem:[#allocation2 + $0x60] sm:$0xff] %v586
        %589 = vst [vmem:[#allocation2 + $0x68] sm:$0xff] %v587
        %v590 = vpack.c.bf16 %v458, %v456
        %v591 = vpack.c.bf16 %v459, %v457
        %592 = vst [vmem:[#allocation2 + $0x80] sm:$0xff] %v590
        %593 = vst [vmem:[#allocation2 + $0x88] sm:$0xff] %v591
        %594 = vrot.lane.b32.xlu0 %v456, 127
        %v595 = vpop.permute.xlu0 %594
        %596 = vrot.lane.b32.xlu0 %v458, 127
        %v597 = vpop.permute.xlu0 %596
        %598 = vrot.lane.b32.xlu0 %v457, 127
        %v599 = vpop.permute.xlu0 %598
        %600 = vrot.lane.b32.xlu0 %v459, 127
        %v601 = vpop.permute.xlu0 %600
        %vm602 = vcmp.lt.s32.totalorder %v469, 127
        %v603 = vsel %vm602, %v595, %v599
        %v604 = vsel %vm602, %v597, %v601
        %v605 = vsel %vm602, %v599, %v595
        %v606 = vsel %vm602, %v601, %v597
        %v608 = vlaneseq
        %v609 = vshrl.u32 %v608, 7
        %v610 = vsub.s32 0, %v609
        %v611 = vrot.slane %v359, %v610
        %v612 = vlaneseq
        %v613 = vshrl.u32 %v612, 7
        %v614 = vsub.s32 1, %v613
        %v615 = vrot.slane %v359, %v614
        %v618 = vmul.f32 %v603, %v611
        %v619 = vmul.f32 %v605, %v615
        %v620 = vmul.f32 %v604, %v611
        %v621 = vmul.f32 %v606, %v615
        %v622 = vpack.c.bf16 %v620, %v618
        %v623 = vpack.c.bf16 %v621, %v619
        %624 = vst [vmem:[#allocation2 + $0xa0] sm:$0xff] %v622
        %625 = vst [vmem:[#allocation2 + $0xa8] sm:$0xff] %v623
        %626 = vrot.lane.b32.xlu0 %v456, 113
        %v627 = vpop.permute.xlu0 %626
        %628 = vrot.lane.b32.xlu0 %v458, 113
        %v629 = vpop.permute.xlu0 %628
        %630 = vrot.lane.b32.xlu0 %v457, 113
        %v631 = vpop.permute.xlu0 %630
        %632 = vrot.lane.b32.xlu0 %v459, 113
        %v633 = vpop.permute.xlu0 %632
        %vm634 = vcmp.lt.s32.totalorder %v469, 113
        %v635 = vsel %vm634, %v627, %v631
        %v636 = vsel %vm634, %v629, %v633
        %v637 = vsel %vm634, %v631, %v627
        %v638 = vsel %vm634, %v633, %v629
        %v640 = vlaneseq
        %v641 = vshrl.u32 %v640, 7
        %v642 = vsub.s32 0, %v641
        %v643 = vrot.slane %v360, %v642
        %v644 = vlaneseq
        %v645 = vshrl.u32 %v644, 7
        %v646 = vsub.s32 1, %v645
        %v647 = vrot.slane %v360, %v646
        %v650 = vmul.f32 %v635, %v643
        %v651 = vmul.f32 %v637, %v647
        %v652 = vmul.f32 %v636, %v643
        %v653 = vmul.f32 %v638, %v647
        %v654 = vpack.c.bf16 %v652, %v650
        %v655 = vpack.c.bf16 %v653, %v651
        %656 = vst [vmem:[#allocation2 + $0xc0] sm:$0xff] %v654
        %657 = vst [vmem:[#allocation2 + $0xc8] sm:$0xff] %v655
        %658 = vrot.lane.b32.xlu0 %v456, 112
        %v659 = vpop.permute.xlu0 %658
        %660 = vrot.lane.b32.xlu0 %v458, 112
        %v661 = vpop.permute.xlu0 %660
        %662 = vrot.lane.b32.xlu0 %v457, 112
        %v663 = vpop.permute.xlu0 %662
        %664 = vrot.lane.b32.xlu0 %v459, 112
        %v665 = vpop.permute.xlu0 %664
        %vm666 = vcmp.lt.s32.totalorder %v469, 112
        %v667 = vsel %vm666, %v659, %v663
        %v668 = vsel %vm666, %v661, %v665
        %v669 = vsel %vm666, %v663, %v659
        %v670 = vsel %vm666, %v665, %v661
        %v672 = vlaneseq
        %v673 = vshrl.u32 %v672, 7
        %v674 = vsub.s32 0, %v673
        %v675 = vrot.slane %v361, %v674
        %v676 = vlaneseq
        %v677 = vshrl.u32 %v676, 7
        %v678 = vsub.s32 1, %v677
        %v679 = vrot.slane %v361, %v678
        %v682 = vmul.f32 %v667, %v675
        %v683 = vmul.f32 %v669, %v679
        %v684 = vmul.f32 %v668, %v675
        %v685 = vmul.f32 %v670, %v679
        %v686 = vpack.c.bf16 %v684, %v682
        %v687 = vpack.c.bf16 %v685, %v683
        %688 = vst [vmem:[#allocation2 + $0xe0] sm:$0xff] %v686
        %689 = vst [vmem:[#allocation2 + $0xe8] sm:$0xff] %v687
        %690 = vrot.lane.b32.xlu0 %v456, 111
        %v691 = vpop.permute.xlu0 %690
        %692 = vrot.lane.b32.xlu0 %v458, 111
        %v693 = vpop.permute.xlu0 %692
        %694 = vrot.lane.b32.xlu0 %v457, 111
        %v695 = vpop.permute.xlu0 %694
        %696 = vrot.lane.b32.xlu0 %v459, 111
        %v697 = vpop.permute.xlu0 %696
        %vm698 = vcmp.lt.s32.totalorder %v469, 111
        %v699 = vsel %vm698, %v691, %v695
        %v700 = vsel %vm698, %v693, %v697
        %v701 = vsel %vm698, %v695, %v691
        %v702 = vsel %vm698, %v697, %v693
        %v704 = vlaneseq
        %v705 = vshrl.u32 %v704, 7
        %v706 = vsub.s32 0, %v705
        %v707 = vrot.slane %v362, %v706
        %v708 = vlaneseq
        %v709 = vshrl.u32 %v708, 7
        %v710 = vsub.s32 1, %v709
        %v711 = vrot.slane %v362, %v710
        %v714 = vmul.f32 %v699, %v707
        %v715 = vmul.f32 %v701, %v711
        %v716 = vmul.f32 %v700, %v707
        %v717 = vmul.f32 %v702, %v711
        %v718 = vpack.c.bf16 %v716, %v714
        %v719 = vpack.c.bf16 %v717, %v715
        %720 = vst [vmem:[#allocation2 + $0x100] sm:$0xff] %v718
        %721 = vst [vmem:[#allocation2 + $0x108] sm:$0xff] %v719
        %s722 = scalar_lea.vmem %s317, 32 [#allocation3]
        %v723 = vld [vmem:[%s722] sm:$0xff]
        %v724 = vld [vmem:[%s722 + $0x8] sm:$0xff]
        %v725 = vld [vmem:[%s722 + $0x10] sm:$0xff]
        %v726 = vld [vmem:[%s722 + $0x18] sm:$0xff]
        %v727 = vmul.f32 %v723, %v723
        %v728 = vmul.f32 %v724, %v724
        %v729 = vmul.f32 %v725, %v725
        %v730 = vmul.f32 %v726, %v726
        %v731 = vadd.f32 %v723, %v724
        %732 = vadd.xlane.f32.xlu0 %v731
        %v733 = vpop.xlane.xlu0 %732
        %v734 = vadd.f32 %v725, %v726
        %735 = vadd.xlane.f32.xlu0 %v734
        %v736 = vpop.xlane.xlu0 %735
        %v737 = vadd.f32 %v727, %v728
        %738 = vadd.xlane.f32.xlu0 %v737
        %v739 = vpop.xlane.xlu0 %738
        %v740 = vadd.f32 %v729, %v730
        %741 = vadd.xlane.f32.xlu0 %v740
        %v742 = vpop.xlane.xlu0 %741
        %v743 = vsel %vm387, %v733, 0.0
        %v744 = vsel %vm387, %v736, 0.0
        %v745 = vadd.f32 %v743, %v744
        %746 = vadd.xlane.f32.xlu0 %v745
        %v747 = vpop.xlane.xlu0 %746
        %v748 = vrot.slane %v747, 4
        %v749 = vadd.f32 %v747, %v748
        %v750 = vrot.slane %v749, 2
        %v751 = vadd.f32 %v749, %v750
        %v752 = vrot.slane %v751, 1
        %v753 = vadd.f32 %v751, %v752
        %s754 = vtos %v753
        %v755 = vsel %vm387, %v739, 0.0
        %v756 = vsel %vm387, %v742, 0.0
        %v757 = vadd.f32 %v755, %v756
        %758 = vadd.xlane.f32.xlu0 %v757
        %v759 = vpop.xlane.xlu0 %758
        %v760 = vrot.slane %v759, 4
        %v761 = vadd.f32 %v759, %v760
        %v762 = vrot.slane %v761, 2
        %v763 = vadd.f32 %v761, %v762
        %v764 = vrot.slane %v763, 1
        %v765 = vadd.f32 %v763, %v764
        %s766 = vtos %v765
        %s767 = smul.f32 %s754, 0.0009765625
        %s768 = smul.f32 %s766, 0.0009765625
        %s769 = smul.f32 %s767, %s767
        %s770 = ssub.f32 %s768, %s769
        %s771 = sadd.f32 %s770, 1e-05
        %v772 = vstv %s771
        %v773 = vrsqrt.pop %v772
        %s774 = vtos %v773
        %v775 = vstv %s774
        %v776 = vmul.f32 %v363, %v775
        %v777 = vmul.f32 %v364, %v775
        %v778 = vstv %s767
        %v779 = vmul.f32 %v778, %v776
        %v780 = vmul.f32 %v778, %v777
        %v781 = vsub.f32 %v365, %v779
        %v782 = vsub.f32 %v366, %v780
        %784 = vset.pattern.permute.xlu0 0
        %785 = vperm.xlu0 %784, %v776
        %v786 = vpop.permute.xlu0 %785
        %789 = vset.pattern.permute.xlu0 0
        %790 = vperm.xlu0 %789, %v777
        %v791 = vpop.permute.xlu0 %790
        %v793 = vmul.f32 %v723, %v786
        %v794 = vmul.f32 %v724, %v786
        %v795 = vmul.f32 %v725, %v791
        %v796 = vmul.f32 %v726, %v791
        %798 = vset.pattern.permute.xlu0 0
        %799 = vperm.xlu0 %798, %v781
        %v800 = vpop.permute.xlu0 %799
        %803 = vset.pattern.permute.xlu0 0
        %804 = vperm.xlu0 %803, %v782
        %v805 = vpop.permute.xlu0 %804
        %v807 = vadd.f32 %v793, %v800
        %v808 = vadd.f32 %v794, %v800
        %v809 = vadd.f32 %v795, %v805
        %v810 = vadd.f32 %v796, %v805
        %v811 = vmax.f32 %v807, 0.0
        %v812 = vmax.f32 %v808, 0.0
        %v813 = vmax.f32 %v809, 0.0
        %v814 = vmax.f32 %v810, 0.0
        %815 = vrot.lane.b32.xlu0 %v811, 17
        %v816 = vpop.permute.xlu0 %815
        %817 = vrot.lane.b32.xlu0 %v813, 17
        %v818 = vpop.permute.xlu0 %817
        %819 = vrot.lane.b32.xlu0 %v812, 17
        %v820 = vpop.permute.xlu0 %819
        %821 = vrot.lane.b32.xlu0 %v814, 17
        %v822 = vpop.permute.xlu0 %821
        %v823 = vsel %vm470, %v816, %v820
        %v824 = vsel %vm470, %v818, %v822
        %v825 = vsel %vm470, %v820, %v816
        %v826 = vsel %vm470, %v822, %v818
        %v827 = vmul.f32 %v825, %v479
        %v828 = vmul.f32 %v823, %v483
        %v829 = vmul.f32 %v826, %v479
        %v830 = vmul.f32 %v824, %v483
        %v831 = vpack.c.bf16 %v829, %v827
        %v832 = vpack.c.bf16 %v830, %v828
        %833 = vst [vmem:[#allocation2 + $0x10] sm:$0xff] %v831
        %834 = vst [vmem:[#allocation2 + $0x18] sm:$0xff] %v832
        %835 = vrot.lane.b32.xlu0 %v811, 16
        %v836 = vpop.permute.xlu0 %835
        %837 = vrot.lane.b32.xlu0 %v813, 16
        %v838 = vpop.permute.xlu0 %837
        %839 = vrot.lane.b32.xlu0 %v812, 16
        %v840 = vpop.permute.xlu0 %839
        %841 = vrot.lane.b32.xlu0 %v814, 16
        %v842 = vpop.permute.xlu0 %841
        %v843 = vsel %vm502, %v836, %v840
        %v844 = vsel %vm502, %v838, %v842
        %v845 = vsel %vm502, %v840, %v836
        %v846 = vsel %vm502, %v842, %v838
        %v847 = vmul.f32 %v845, %v511
        %v848 = vmul.f32 %v843, %v515
        %v849 = vmul.f32 %v846, %v511
        %v850 = vmul.f32 %v844, %v515
        %v851 = vpack.c.bf16 %v849, %v847
        %v852 = vpack.c.bf16 %v850, %v848
        %853 = vst [vmem:[#allocation2 + $0x30] sm:$0xff] %v851
        %854 = vst [vmem:[#allocation2 + $0x38] sm:$0xff] %v852
        %855 = vrot.lane.b32.xlu0 %v811, 15
        %v856 = vpop.permute.xlu0 %855
        %857 = vrot.lane.b32.xlu0 %v813, 15
        %v858 = vpop.permute.xlu0 %857
        %859 = vrot.lane.b32.xlu0 %v812, 15
        %v860 = vpop.permute.xlu0 %859
        %861 = vrot.lane.b32.xlu0 %v814, 15
        %v862 = vpop.permute.xlu0 %861
        %v863 = vsel %vm534, %v856, %v860
        %v864 = vsel %vm534, %v858, %v862
        %v865 = vsel %vm534, %v860, %v856
        %v866 = vsel %vm534, %v862, %v858
        %v867 = vmul.f32 %v865, %v543
        %v868 = vmul.f32 %v863, %v547
        %v869 = vmul.f32 %v866, %v543
        %v870 = vmul.f32 %v864, %v547
        %v871 = vpack.c.bf16 %v869, %v867
        %v872 = vpack.c.bf16 %v870, %v868
        %873 = vst [vmem:[#allocation2 + $0x50] sm:$0xff] %v871
        %874 = vst [vmem:[#allocation2 + $0x58] sm:$0xff] %v872
        %875 = vrot.lane.b32.xlu0 %v811, 1
        %v876 = vpop.permute.xlu0 %875
        %877 = vrot.lane.b32.xlu0 %v813, 1
        %v878 = vpop.permute.xlu0 %877
        %879 = vrot.lane.b32.xlu0 %v812, 1
        %v880 = vpop.permute.xlu0 %879
        %881 = vrot.lane.b32.xlu0 %v814, 1
        %v882 = vpop.permute.xlu0 %881
        %v883 = vsel %vm566, %v876, %v880
        %v884 = vsel %vm566, %v878, %v882
        %v885 = vsel %vm566, %v880, %v876
        %v886 = vsel %vm566, %v882, %v878
        %v887 = vmul.f32 %v885, %v575
        %v888 = vmul.f32 %v883, %v579
        %v889 = vmul.f32 %v886, %v575
        %v890 = vmul.f32 %v884, %v579
        %v891 = vpack.c.bf16 %v889, %v887
        %v892 = vpack.c.bf16 %v890, %v888
        %893 = vst [vmem:[#allocation2 + $0x70] sm:$0xff] %v891
        %894 = vst [vmem:[#allocation2 + $0x78] sm:$0xff] %v892
        %v895 = vpack.c.bf16 %v813, %v811
        %v896 = vpack.c.bf16 %v814, %v812
        %897 = vst [vmem:[#allocation2 + $0x90] sm:$0xff] %v895
        %898 = vst [vmem:[#allocation2 + $0x98] sm:$0xff] %v896
        %899 = vrot.lane.b32.xlu0 %v811, 127
        %v900 = vpop.permute.xlu0 %899
        %901 = vrot.lane.b32.xlu0 %v813, 127
        %v902 = vpop.permute.xlu0 %901
        %903 = vrot.lane.b32.xlu0 %v812, 127
        %v904 = vpop.permute.xlu0 %903
        %905 = vrot.lane.b32.xlu0 %v814, 127
        %v906 = vpop.permute.xlu0 %905
        %v907 = vsel %vm602, %v900, %v904
        %v908 = vsel %vm602, %v902, %v906
        %v909 = vsel %vm602, %v904, %v900
        %v910 = vsel %vm602, %v906, %v902
        %v911 = vmul.f32 %v907, %v611
        %v912 = vmul.f32 %v909, %v615
        %v913 = vmul.f32 %v908, %v611
        %v914 = vmul.f32 %v910, %v615
        %v915 = vpack.c.bf16 %v913, %v911
        %v916 = vpack.c.bf16 %v914, %v912
        %917 = vst [vmem:[#allocation2 + $0xb0] sm:$0xff] %v915
        %918 = vst [vmem:[#allocation2 + $0xb8] sm:$0xff] %v916
        %919 = vrot.lane.b32.xlu0 %v811, 113
        %v920 = vpop.permute.xlu0 %919
        %921 = vrot.lane.b32.xlu0 %v813, 113
        %v922 = vpop.permute.xlu0 %921
        %923 = vrot.lane.b32.xlu0 %v812, 113
        %v924 = vpop.permute.xlu0 %923
        %925 = vrot.lane.b32.xlu0 %v814, 113
        %v926 = vpop.permute.xlu0 %925
        %v927 = vsel %vm634, %v920, %v924
        %v928 = vsel %vm634, %v922, %v926
        %v929 = vsel %vm634, %v924, %v920
        %v930 = vsel %vm634, %v926, %v922
        %v931 = vmul.f32 %v927, %v643
        %v932 = vmul.f32 %v929, %v647
        %v933 = vmul.f32 %v928, %v643
        %v934 = vmul.f32 %v930, %v647
        %v935 = vpack.c.bf16 %v933, %v931
        %v936 = vpack.c.bf16 %v934, %v932
        %937 = vst [vmem:[#allocation2 + $0xd0] sm:$0xff] %v935
        %938 = vst [vmem:[#allocation2 + $0xd8] sm:$0xff] %v936
        %939 = vrot.lane.b32.xlu0 %v811, 112
        %v940 = vpop.permute.xlu0 %939
        %941 = vrot.lane.b32.xlu0 %v813, 112
        %v942 = vpop.permute.xlu0 %941
        %943 = vrot.lane.b32.xlu0 %v812, 112
        %v944 = vpop.permute.xlu0 %943
        %945 = vrot.lane.b32.xlu0 %v814, 112
        %v946 = vpop.permute.xlu0 %945
        %v947 = vsel %vm666, %v940, %v944
        %v948 = vsel %vm666, %v942, %v946
        %v949 = vsel %vm666, %v944, %v940
        %v950 = vsel %vm666, %v946, %v942
        %v951 = vmul.f32 %v947, %v675
        %v952 = vmul.f32 %v949, %v679
        %v953 = vmul.f32 %v948, %v675
        %v954 = vmul.f32 %v950, %v679
        %v955 = vpack.c.bf16 %v953, %v951
        %v956 = vpack.c.bf16 %v954, %v952
        %957 = vst [vmem:[#allocation2 + $0xf0] sm:$0xff] %v955
        %958 = vst [vmem:[#allocation2 + $0xf8] sm:$0xff] %v956
        %959 = vrot.lane.b32.xlu0 %v811, 111
        %v960 = vpop.permute.xlu0 %959
        %961 = vrot.lane.b32.xlu0 %v813, 111
        %v962 = vpop.permute.xlu0 %961
        %963 = vrot.lane.b32.xlu0 %v812, 111
        %v964 = vpop.permute.xlu0 %963
        %965 = vrot.lane.b32.xlu0 %v814, 111
        %v966 = vpop.permute.xlu0 %965
        %v967 = vsel %vm698, %v960, %v964
        %v968 = vsel %vm698, %v962, %v966
        %v969 = vsel %vm698, %v964, %v960
        %v970 = vsel %vm698, %v966, %v962
        %v971 = vmul.f32 %v967, %v707
        %v972 = vmul.f32 %v969, %v711
        %v973 = vmul.f32 %v968, %v707
        %v974 = vmul.f32 %v970, %v711
        %v975 = vpack.c.bf16 %v973, %v971
        %v976 = vpack.c.bf16 %v974, %v972
        %977 = vst [vmem:[#allocation2 + $0x110] sm:$0xff] %v975
        %978 = vst [vmem:[#allocation2 + $0x118] sm:$0xff] %v976
        %v979 = vld [vmem:[%s4] sm:$0xff]
        %v980 = vld [vmem:[%s4 + $0x8] sm:$0xff]
        %v981 = vld [vmem:[#allocation2] sm:$0xff]
        %v982 = vld [vmem:[#allocation2 + $0x8] sm:$0xff]
        %v983 = vld [vmem:[#allocation2 + $0x10] sm:$0xff]
        %v984 = vld [vmem:[#allocation2 + $0x18] sm:$0xff]
        %v985 = vld [vmem:[#allocation2 + $0x20] sm:$0xff]
        %v986 = vld [vmem:[#allocation2 + $0x28] sm:$0xff]
        %v987 = vld [vmem:[#allocation2 + $0x30] sm:$0xff]
        %v988 = vld [vmem:[#allocation2 + $0x38] sm:$0xff]
        %v989 = vld [vmem:[#allocation2 + $0x40] sm:$0xff]
        %v990 = vld [vmem:[#allocation2 + $0x48] sm:$0xff]
        %v991 = vld [vmem:[#allocation2 + $0x50] sm:$0xff]
        %v992 = vld [vmem:[#allocation2 + $0x58] sm:$0xff]
        %v993 = vld [vmem:[#allocation2 + $0x60] sm:$0xff]
        %v994 = vld [vmem:[#allocation2 + $0x68] sm:$0xff]
        %v995 = vld [vmem:[#allocation2 + $0x70] sm:$0xff]
        %v996 = vld [vmem:[#allocation2 + $0x78] sm:$0xff]
        %v997 = vld [vmem:[#allocation2 + $0x80] sm:$0xff]
        %v998 = vld [vmem:[#allocation2 + $0x88] sm:$0xff]
        %v999 = vld [vmem:[#allocation2 + $0x90] sm:$0xff]
        %v1000 = vld [vmem:[#allocation2 + $0x98] sm:$0xff]
        %v1001 = vld [vmem:[#allocation2 + $0xa0] sm:$0xff]
        %v1002 = vld [vmem:[#allocation2 + $0xa8] sm:$0xff]
        %v1003 = vld [vmem:[#allocation2 + $0xb0] sm:$0xff]
        %v1004 = vld [vmem:[#allocation2 + $0xb8] sm:$0xff]
        %v1005 = vld [vmem:[#allocation2 + $0xc0] sm:$0xff]
        %v1006 = vld [vmem:[#allocation2 + $0xc8] sm:$0xff]
        %v1007 = vld [vmem:[#allocation2 + $0xd0] sm:$0xff]
        %v1008 = vld [vmem:[#allocation2 + $0xd8] sm:$0xff]
        %v1009 = vld [vmem:[#allocation2 + $0xe0] sm:$0xff]
        %v1010 = vld [vmem:[#allocation2 + $0xe8] sm:$0xff]
        %v1011 = vld [vmem:[#allocation2 + $0xf0] sm:$0xff]
        %v1012 = vld [vmem:[#allocation2 + $0xf8] sm:$0xff]
        %v1013 = vld [vmem:[#allocation2 + $0x100] sm:$0xff]
        %v1014 = vld [vmem:[#allocation2 + $0x108] sm:$0xff]
        %v1015 = vld [vmem:[#allocation2 + $0x110] sm:$0xff]
        %v1016 = vld [vmem:[#allocation2 + $0x118] sm:$0xff]
        %v1019 = vunpack.c.l.b16 %v979
        %v1020 = vunpack.c.h.b16 %v979
        %v1021 = vunpack.c.l.b16 %v980
        %v1022 = vunpack.c.h.b16 %v980
        %v1023 = vpack.c.b16 %v1021, %v1019
        %v1024 = vpack.c.b16 %v1022, %v1020
        %vm1026 = vcmask 130048
        %v1028 = vsel %vm1026, %v1024, 0
        %1030 = vmatprep.subr.bf16.mxu0 %v982
        %1031 = vmatpush1.bf16.msra.mxu0 %v981
        %1032 = vmatprep.subr.bf16.mxu0 %v986
        %1033 = vmatpush1.bf16.msra.mxu0 %v985
        %1034 = vmatprep.subr.bf16.mxu0 %v990
        %1035 = vmatpush1.bf16.msra.mxu0 %v989
        %1036 = vmatprep.subr.bf16.mxu0 %v994
        %1037 = vmatpush1.bf16.msra.mxu0 %v993
        %1038 = vmatprep.subr.bf16.mxu0 %v998
        %1039 = vmatpush1.bf16.msra.mxu0 %v997
        %1040 = vmatprep.subr.bf16.mxu0 %v1002
        %1041 = vmatpush1.bf16.msra.mxu0 %v1001
        %1042 = vmatprep.subr.bf16.mxu0 %v1006
        %1043 = vmatpush1.bf16.msra.mxu0 %v1005
        %1044 = vmatprep.subr.bf16.mxu0 %v1010
        %1045 = vmatpush1.bf16.msra.mxu0 %v1009
        %1046 = vmatprep.subr.bf16.mxu0 %v1014
        %1047 = vmatpush1.bf16.msra.mxu0 %v1013
        %1048 = vmatprep.subr.bf16.mxu0 0
        %1049 = vmatpush1.bf16.msra.mxu0 0
        %1050 = vmatprep.subr.bf16.mxu0 0
        %1051 = vmatpush1.bf16.msra.mxu0 0
        %1052 = vmatprep.subr.bf16.mxu0 0
        %1053 = vmatpush1.bf16.msra.mxu0 0
        %1054 = vmatprep.subr.bf16.mxu0 0
        %1055 = vmatpush1.bf16.msra.mxu0 0
        %1056 = vmatprep.subr.bf16.mxu0 0
        %1057 = vmatpush1.bf16.msra.mxu0 0
        %1058 = vmatprep.subr.bf16.mxu0 0
        %1059 = vmatpush1.bf16.msra.mxu0 0
        %1060 = vmatprep.subr.bf16.mxu0 0
        %1061 = vmatpush1.bf16.msra.mxu0 0
        %1062 = vmatprep.mubr.bf16.mxu0 %v1028
        %1063 = vmatmul.mubr.bf16.gmra.mrb[0].mxu0 %v1023
        %v1064 = vpop.f32.mrb[0].mxu0
        %v1065 = vadd.f32 0.0, %v1064
        %v1066 = vpop.f32.mrb[0].mxu0
        %v1067 = vadd.f32 0.0, %v1066
        %v1068 = vpop.f32.mrb[0].mxu0
        %v1069 = vadd.f32 0.0, %v1068
        %v1070 = vpop.f32.mrb[0].mxu0
        %v1071 = vadd.f32 0.0, %v1070
        %1072 = vdwg.mxu0
        %1073 = vmatprep.subr.bf16.mxu0 %v984
        %1074 = vmatpush1.bf16.msra.mxu0 %v983
        %1075 = vmatprep.subr.bf16.mxu0 %v988
        %1076 = vmatpush1.bf16.msra.mxu0 %v987
        %1077 = vmatprep.subr.bf16.mxu0 %v992
        %1078 = vmatpush1.bf16.msra.mxu0 %v991
        %1079 = vmatprep.subr.bf16.mxu0 %v996
        %1080 = vmatpush1.bf16.msra.mxu0 %v995
        %1081 = vmatprep.subr.bf16.mxu0 %v1000
        %1082 = vmatpush1.bf16.msra.mxu0 %v999
        %1083 = vmatprep.subr.bf16.mxu0 %v1004
        %1084 = vmatpush1.bf16.msra.mxu0 %v1003
        %1085 = vmatprep.subr.bf16.mxu0 %v1008
        %1086 = vmatpush1.bf16.msra.mxu0 %v1007
        %1087 = vmatprep.subr.bf16.mxu0 %v1012
        %1088 = vmatpush1.bf16.msra.mxu0 %v1011
        %1089 = vmatprep.subr.bf16.mxu0 %v1016
        %1090 = vmatpush1.bf16.msra.mxu0 %v1015
        %1091 = vmatprep.subr.bf16.mxu0 0
        %1092 = vmatpush1.bf16.msra.mxu0 0
        %1093 = vmatprep.subr.bf16.mxu0 0
        %1094 = vmatpush1.bf16.msra.mxu0 0
        %1095 = vmatprep.subr.bf16.mxu0 0
        %1096 = vmatpush1.bf16.msra.mxu0 0
        %1097 = vmatprep.subr.bf16.mxu0 0
        %1098 = vmatpush1.bf16.msra.mxu0 0
        %1099 = vmatprep.subr.bf16.mxu0 0
        %1100 = vmatpush1.bf16.msra.mxu0 0
        %1101 = vmatprep.subr.bf16.mxu0 0
        %1102 = vmatpush1.bf16.msra.mxu0 0
        %1103 = vmatprep.subr.bf16.mxu0 0
        %1104 = vmatpush1.bf16.msra.mxu0 0
        %1105 = vmatprep.mubr.bf16.mxu0 %v1028
        %1106 = vmatmul.mubr.bf16.gmra.mrb[0].mxu0 %v1023
        %v1107 = vpop.f32.mrb[0].mxu0
        %v1108 = vadd.f32 0.0, %v1107
        %v1109 = vpop.f32.mrb[0].mxu0
        %v1110 = vadd.f32 0.0, %v1109
        %v1111 = vpop.f32.mrb[0].mxu0
        %v1112 = vadd.f32 0.0, %v1111
        %v1113 = vpop.f32.mrb[0].mxu0
        %v1114 = vadd.f32 0.0, %v1113
        %1115 = vdwg.mxu0
        %v1116 = vld [vmem:[%s5] sm:$0xff]
        %v1117 = vld [vmem:[%s5 + $0x8] sm:$0xff]
        %v1118 = vld [vmem:[%s6] sm:$0xff]
        %v1119 = vld [vmem:[%s6 + $0x8] sm:$0xff]
        %v1120 = vmul.f32 %v1065, %v1065
        %v1121 = vmul.f32 %v1067, %v1067
        %v1122 = vmul.f32 %v1069, %v1069
        %v1123 = vmul.f32 %v1071, %v1071
        %v1124 = vadd.f32 %v1065, %v1067
        %1125 = vadd.xlane.f32.xlu0 %v1124
        %v1126 = vpop.xlane.xlu0 %1125
        %v1127 = vadd.f32 %v1069, %v1071
        %1128 = vadd.xlane.f32.xlu0 %v1127
        %v1129 = vpop.xlane.xlu0 %1128
        %v1130 = vadd.f32 %v1120, %v1121
        %1131 = vadd.xlane.f32.xlu0 %v1130
        %v1132 = vpop.xlane.xlu0 %1131
        %v1133 = vadd.f32 %v1122, %v1123
        %1134 = vadd.xlane.f32.xlu0 %v1133
        %v1135 = vpop.xlane.xlu0 %1134
        %v1136 = vsel %vm387, %v1126, 0.0
        %v1137 = vsel %vm387, %v1129, 0.0
        %v1138 = vadd.f32 %v1136, %v1137
        %1139 = vadd.xlane.f32.xlu0 %v1138
        %v1140 = vpop.xlane.xlu0 %1139
        %v1141 = vrot.slane %v1140, 4
        %v1142 = vadd.f32 %v1140, %v1141
        %v1143 = vrot.slane %v1142, 2
        %v1144 = vadd.f32 %v1142, %v1143
        %v1145 = vrot.slane %v1144, 1
        %v1146 = vadd.f32 %v1144, %v1145
        %s1147 = vtos %v1146
        %v1148 = vsel %vm387, %v1132, 0.0
        %v1149 = vsel %vm387, %v1135, 0.0
        %v1150 = vadd.f32 %v1148, %v1149
        %1151 = vadd.xlane.f32.xlu0 %v1150
        %v1152 = vpop.xlane.xlu0 %1151
        %v1153 = vrot.slane %v1152, 4
        %v1154 = vadd.f32 %v1152, %v1153
        %v1155 = vrot.slane %v1154, 2
        %v1156 = vadd.f32 %v1154, %v1155
        %v1157 = vrot.slane %v1156, 1
        %v1158 = vadd.f32 %v1156, %v1157
        %s1159 = vtos %v1158
        %s1160 = smul.f32 %s1147, 0.00048828125
        %s1161 = smul.f32 %s1159, 0.00048828125
        %s1162 = smul.f32 %s1160, %s1160
        %s1163 = ssub.f32 %s1161, %s1162
        %s1164 = sadd.f32 %s1163, 1e-05
        %v1165 = vstv %s1164
        %v1166 = vrsqrt.pop %v1165
        %s1167 = vtos %v1166
        %v1168 = vstv %s1167
        %v1169 = vmul.f32 %v1116, %v1168
        %v1170 = vmul.f32 %v1117, %v1168
        %v1171 = vstv %s1160
        %v1172 = vmul.f32 %v1171, %v1169
        %v1173 = vmul.f32 %v1171, %v1170
        %v1174 = vsub.f32 %v1118, %v1172
        %v1175 = vsub.f32 %v1119, %v1173
        %1177 = vset.pattern.permute.xlu0 0
        %1178 = vperm.xlu0 %1177, %v1169
        %v1179 = vpop.permute.xlu0 %1178
        %1182 = vset.pattern.permute.xlu0 0
        %1183 = vperm.xlu0 %1182, %v1170
        %v1184 = vpop.permute.xlu0 %1183
        %v1186 = vmul.f32 %v1065, %v1179
        %v1187 = vmul.f32 %v1067, %v1179
        %v1188 = vmul.f32 %v1069, %v1184
        %v1189 = vmul.f32 %v1071, %v1184
        %1191 = vset.pattern.permute.xlu0 0
        %1192 = vperm.xlu0 %1191, %v1174
        %v1193 = vpop.permute.xlu0 %1192
        %1196 = vset.pattern.permute.xlu0 0
        %1197 = vperm.xlu0 %1196, %v1175
        %v1198 = vpop.permute.xlu0 %1197
        %v1200 = vadd.f32 %v1186, %v1193
        %v1201 = vadd.f32 %v1187, %v1193
        %v1202 = vadd.f32 %v1188, %v1198
        %v1203 = vadd.f32 %v1189, %v1198
        %v1204 = vmax.f32 %v1200, 0.0
        %v1205 = vmax.f32 %v1201, 0.0
        %v1206 = vmax.f32 %v1202, 0.0
        %v1207 = vmax.f32 %v1203, 0.0
        %1208 = vrot.lane.b32.xlu0 %v1204, 17
        %v1209 = vpop.permute.xlu0 %1208
        %1210 = vrot.lane.b32.xlu0 %v1206, 17
        %v1211 = vpop.permute.xlu0 %1210
        %1212 = vrot.lane.b32.xlu0 %v1205, 17
        %v1213 = vpop.permute.xlu0 %1212
        %1214 = vrot.lane.b32.xlu0 %v1207, 17
        %v1215 = vpop.permute.xlu0 %1214
        %v1216 = vsel %vm470, %v1209, %v1213
        %v1217 = vsel %vm470, %v1211, %v1215
        %v1218 = vsel %vm470, %v1213, %v1209
        %v1219 = vsel %vm470, %v1215, %v1211
        %v1220 = vmul.f32 %v1218, %v479
        %v1221 = vmul.f32 %v1216, %v483
        %v1222 = vmul.f32 %v1219, %v479
        %v1223 = vmul.f32 %v1217, %v483
        %v1224 = vpack.c.bf16 %v1222, %v1220
        %v1225 = vpack.c.bf16 %v1223, %v1221
        %1226 = vst [vmem:[#allocation2] sm:$0xff] %v1224
        %1227 = vst [vmem:[#allocation2 + $0x8] sm:$0xff] %v1225
        %1228 = vrot.lane.b32.xlu0 %v1204, 16
        %v1229 = vpop.permute.xlu0 %1228
        %1230 = vrot.lane.b32.xlu0 %v1206, 16
        %v1231 = vpop.permute.xlu0 %1230
        %1232 = vrot.lane.b32.xlu0 %v1205, 16
        %v1233 = vpop.permute.xlu0 %1232
        %1234 = vrot.lane.b32.xlu0 %v1207, 16
        %v1235 = vpop.permute.xlu0 %1234
        %v1236 = vsel %vm502, %v1229, %v1233
        %v1237 = vsel %vm502, %v1231, %v1235
        %v1238 = vsel %vm502, %v1233, %v1229
        %v1239 = vsel %vm502, %v1235, %v1231
        %v1240 = vmul.f32 %v1238, %v511
        %v1241 = vmul.f32 %v1236, %v515
        %v1242 = vmul.f32 %v1239, %v511
        %v1243 = vmul.f32 %v1237, %v515
        %v1244 = vpack.c.bf16 %v1242, %v1240
        %v1245 = vpack.c.bf16 %v1243, %v1241
        %1246 = vst [vmem:[#allocation2 + $0x20] sm:$0xff] %v1244
        %1247 = vst [vmem:[#allocation2 + $0x28] sm:$0xff] %v1245
        %1248 = vrot.lane.b32.xlu0 %v1204, 15
        %v1249 = vpop.permute.xlu0 %1248
        %1250 = vrot.lane.b32.xlu0 %v1206, 15
        %v1251 = vpop.permute.xlu0 %1250
        %1252 = vrot.lane.b32.xlu0 %v1205, 15
        %v1253 = vpop.permute.xlu0 %1252
        %1254 = vrot.lane.b32.xlu0 %v1207, 15
        %v1255 = vpop.permute.xlu0 %1254
        %v1256 = vsel %vm534, %v1249, %v1253
        %v1257 = vsel %vm534, %v1251, %v1255
        %v1258 = vsel %vm534, %v1253, %v1249
        %v1259 = vsel %vm534, %v1255, %v1251
        %v1260 = vmul.f32 %v1258, %v543
        %v1261 = vmul.f32 %v1256, %v547
        %v1262 = vmul.f32 %v1259, %v543
        %v1263 = vmul.f32 %v1257, %v547
        %v1264 = vpack.c.bf16 %v1262, %v1260
        %v1265 = vpack.c.bf16 %v1263, %v1261
        %1266 = vst [vmem:[#allocation2 + $0x40] sm:$0xff] %v1264
        %1267 = vst [vmem:[#allocation2 + $0x48] sm:$0xff] %v1265
        %1268 = vrot.lane.b32.xlu0 %v1204, 1
        %v1269 = vpop.permute.xlu0 %1268
        %1270 = vrot.lane.b32.xlu0 %v1206, 1
        %v1271 = vpop.permute.xlu0 %1270
        %1272 = vrot.lane.b32.xlu0 %v1205, 1
        %v1273 = vpop.permute.xlu0 %1272
        %1274 = vrot.lane.b32.xlu0 %v1207, 1
        %v1275 = vpop.permute.xlu0 %1274
        %v1276 = vsel %vm566, %v1269, %v1273
        %v1277 = vsel %vm566, %v1271, %v1275
        %v1278 = vsel %vm566, %v1273, %v1269
        %v1279 = vsel %vm566, %v1275, %v1271
        %v1280 = vmul.f32 %v1278, %v575
        %v1281 = vmul.f32 %v1276, %v579
        %v1282 = vmul.f32 %v1279, %v575
        %v1283 = vmul.f32 %v1277, %v579
        %v1284 = vpack.c.bf16 %v1282, %v1280
        %v1285 = vpack.c.bf16 %v1283, %v1281
        %1286 = vst [vmem:[#allocation2 + $0x60] sm:$0xff] %v1284
        %1287 = vst [vmem:[#allocation2 + $0x68] sm:$0xff] %v1285
        %v1288 = vpack.c.bf16 %v1206, %v1204
        %v1289 = vpack.c.bf16 %v1207, %v1205
        %1290 = vst [vmem:[#allocation2 + $0x80] sm:$0xff] %v1288
        %1291 = vst [vmem:[#allocation2 + $0x88] sm:$0xff] %v1289
        %1292 = vrot.lane.b32.xlu0 %v1204, 127
        %v1293 = vpop.permute.xlu0 %1292
        %1294 = vrot.lane.b32.xlu0 %v1206, 127
        %v1295 = vpop.permute.xlu0 %1294
        %1296 = vrot.lane.b32.xlu0 %v1205, 127
        %v1297 = vpop.permute.xlu0 %1296
        %1298 = vrot.lane.b32.xlu0 %v1207, 127
        %v1299 = vpop.permute.xlu0 %1298
        %v1300 = vsel %vm602, %v1293, %v1297
        %v1301 = vsel %vm602, %v1295, %v1299
        %v1302 = vsel %vm602, %v1297, %v1293
        %v1303 = vsel %vm602, %v1299, %v1295
        %v1304 = vmul.f32 %v1300, %v611
        %v1305 = vmul.f32 %v1302, %v615
        %v1306 = vmul.f32 %v1301, %v611
        %v1307 = vmul.f32 %v1303, %v615
        %v1308 = vpack.c.bf16 %v1306, %v1304
        %v1309 = vpack.c.bf16 %v1307, %v1305
        %1310 = vst [vmem:[#allocation2 + $0xa0] sm:$0xff] %v1308
        %1311 = vst [vmem:[#allocation2 + $0xa8] sm:$0xff] %v1309
        %1312 = vrot.lane.b32.xlu0 %v1204, 113
        %v1313 = vpop.permute.xlu0 %1312
        %1314 = vrot.lane.b32.xlu0 %v1206, 113
        %v1315 = vpop.permute.xlu0 %1314
        %1316 = vrot.lane.b32.xlu0 %v1205, 113
        %v1317 = vpop.permute.xlu0 %1316
        %1318 = vrot.lane.b32.xlu0 %v1207, 113
        %v1319 = vpop.permute.xlu0 %1318
        %v1320 = vsel %vm634, %v1313, %v1317
        %v1321 = vsel %vm634, %v1315, %v1319
        %v1322 = vsel %vm634, %v1317, %v1313
        %v1323 = vsel %vm634, %v1319, %v1315
        %v1324 = vmul.f32 %v1320, %v643
        %v1325 = vmul.f32 %v1322, %v647
        %v1326 = vmul.f32 %v1321, %v643
        %v1327 = vmul.f32 %v1323, %v647
        %v1328 = vpack.c.bf16 %v1326, %v1324
        %v1329 = vpack.c.bf16 %v1327, %v1325
        %1330 = vst [vmem:[#allocation2 + $0xc0] sm:$0xff] %v1328
        %1331 = vst [vmem:[#allocation2 + $0xc8] sm:$0xff] %v1329
        %1332 = vrot.lane.b32.xlu0 %v1204, 112
        %v1333 = vpop.permute.xlu0 %1332
        %1334 = vrot.lane.b32.xlu0 %v1206, 112
        %v1335 = vpop.permute.xlu0 %1334
        %1336 = vrot.lane.b32.xlu0 %v1205, 112
        %v1337 = vpop.permute.xlu0 %1336
        %1338 = vrot.lane.b32.xlu0 %v1207, 112
        %v1339 = vpop.permute.xlu0 %1338
        %v1340 = vsel %vm666, %v1333, %v1337
        %v1341 = vsel %vm666, %v1335, %v1339
        %v1342 = vsel %vm666, %v1337, %v1333
        %v1343 = vsel %vm666, %v1339, %v1335
        %v1344 = vmul.f32 %v1340, %v675
        %v1345 = vmul.f32 %v1342, %v679
        %v1346 = vmul.f32 %v1341, %v675
        %v1347 = vmul.f32 %v1343, %v679
        %v1348 = vpack.c.bf16 %v1346, %v1344
        %v1349 = vpack.c.bf16 %v1347, %v1345
        %1350 = vst [vmem:[#allocation2 + $0xe0] sm:$0xff] %v1348
        %1351 = vst [vmem:[#allocation2 + $0xe8] sm:$0xff] %v1349
        %1352 = vrot.lane.b32.xlu0 %v1204, 111
        %v1353 = vpop.permute.xlu0 %1352
        %1354 = vrot.lane.b32.xlu0 %v1206, 111
        %v1355 = vpop.permute.xlu0 %1354
        %1356 = vrot.lane.b32.xlu0 %v1205, 111
        %v1357 = vpop.permute.xlu0 %1356
        %1358 = vrot.lane.b32.xlu0 %v1207, 111
        %v1359 = vpop.permute.xlu0 %1358
        %v1360 = vsel %vm698, %v1353, %v1357
        %v1361 = vsel %vm698, %v1355, %v1359
        %v1362 = vsel %vm698, %v1357, %v1353
        %v1363 = vsel %vm698, %v1359, %v1355
        %v1364 = vmul.f32 %v1360, %v707
        %v1365 = vmul.f32 %v1362, %v711
        %v1366 = vmul.f32 %v1361, %v707
        %v1367 = vmul.f32 %v1363, %v711
        %v1368 = vpack.c.bf16 %v1366, %v1364
        %v1369 = vpack.c.bf16 %v1367, %v1365
        %1370 = vst [vmem:[#allocation2 + $0x100] sm:$0xff] %v1368
        %1371 = vst [vmem:[#allocation2 + $0x108] sm:$0xff] %v1369
        %v1372 = vmul.f32 %v1108, %v1108
        %v1373 = vmul.f32 %v1110, %v1110
        %v1374 = vmul.f32 %v1112, %v1112
        %v1375 = vmul.f32 %v1114, %v1114
        %v1376 = vadd.f32 %v1108, %v1110
        %1377 = vadd.xlane.f32.xlu0 %v1376
        %v1378 = vpop.xlane.xlu0 %1377
        %v1379 = vadd.f32 %v1112, %v1114
        %1380 = vadd.xlane.f32.xlu0 %v1379
        %v1381 = vpop.xlane.xlu0 %1380
        %v1382 = vadd.f32 %v1372, %v1373
        %1383 = vadd.xlane.f32.xlu0 %v1382
        %v1384 = vpop.xlane.xlu0 %1383
        %v1385 = vadd.f32 %v1374, %v1375
        %1386 = vadd.xlane.f32.xlu0 %v1385
        %v1387 = vpop.xlane.xlu0 %1386
        %v1388 = vsel %vm387, %v1378, 0.0
        %v1389 = vsel %vm387, %v1381, 0.0
        %v1390 = vadd.f32 %v1388, %v1389
        %1391 = vadd.xlane.f32.xlu0 %v1390
        %v1392 = vpop.xlane.xlu0 %1391
        %v1393 = vrot.slane %v1392, 4
        %v1394 = vadd.f32 %v1392, %v1393
        %v1395 = vrot.slane %v1394, 2
        %v1396 = vadd.f32 %v1394, %v1395
        %v1397 = vrot.slane %v1396, 1
        %v1398 = vadd.f32 %v1396, %v1397
        %s1399 = vtos %v1398
        %v1400 = vsel %vm387, %v1384, 0.0
        %v1401 = vsel %vm387, %v1387, 0.0
        %v1402 = vadd.f32 %v1400, %v1401
        %1403 = vadd.xlane.f32.xlu0 %v1402
        %v1404 = vpop.xlane.xlu0 %1403
        %v1405 = vrot.slane %v1404, 4
        %v1406 = vadd.f32 %v1404, %v1405
        %v1407 = vrot.slane %v1406, 2
        %v1408 = vadd.f32 %v1406, %v1407
        %v1409 = vrot.slane %v1408, 1
        %v1410 = vadd.f32 %v1408, %v1409
        %s1411 = vtos %v1410
        %s1412 = smul.f32 %s1399, 0.00048828125
        %s1413 = smul.f32 %s1411, 0.00048828125
        %s1414 = smul.f32 %s1412, %s1412
        %s1415 = ssub.f32 %s1413, %s1414
        %s1416 = sadd.f32 %s1415, 1e-05
        %v1417 = vstv %s1416
        %v1418 = vrsqrt.pop %v1417
        %s1419 = vtos %v1418
        %v1420 = vstv %s1419
        %v1421 = vmul.f32 %v1116, %v1420
        %v1422 = vmul.f32 %v1117, %v1420
        %v1423 = vstv %s1412
        %v1424 = vmul.f32 %v1423, %v1421
        %v1425 = vmul.f32 %v1423, %v1422
        %v1426 = vsub.f32 %v1118, %v1424
        %v1427 = vsub.f32 %v1119, %v1425
        %1429 = vset.pattern.permute.xlu0 0
        %1430 = vperm.xlu0 %1429, %v1421
        %v1431 = vpop.permute.xlu0 %1430
        %1434 = vset.pattern.permute.xlu0 0
        %1435 = vperm.xlu0 %1434, %v1422
        %v1436 = vpop.permute.xlu0 %1435
        %v1438 = vmul.f32 %v1108, %v1431
        %v1439 = vmul.f32 %v1110, %v1431
        %v1440 = vmul.f32 %v1112, %v1436
        %v1441 = vmul.f32 %v1114, %v1436
        %1443 = vset.pattern.permute.xlu0 0
        %1444 = vperm.xlu0 %1443, %v1426
        %v1445 = vpop.permute.xlu0 %1444
        %1448 = vset.pattern.permute.xlu0 0
        %1449 = vperm.xlu0 %1448, %v1427
        %v1450 = vpop.permute.xlu0 %1449
        %v1452 = vadd.f32 %v1438, %v1445
        %v1453 = vadd.f32 %v1439, %v1445
        %v1454 = vadd.f32 %v1440, %v1450
        %v1455 = vadd.f32 %v1441, %v1450
        %v1456 = vmax.f32 %v1452, 0.0
        %v1457 = vmax.f32 %v1453, 0.0
        %v1458 = vmax.f32 %v1454, 0.0
        %v1459 = vmax.f32 %v1455, 0.0
        %1460 = vrot.lane.b32.xlu0 %v1456, 17
        %v1461 = vpop.permute.xlu0 %1460
        %1462 = vrot.lane.b32.xlu0 %v1458, 17
        %v1463 = vpop.permute.xlu0 %1462
        %1464 = vrot.lane.b32.xlu0 %v1457, 17
        %v1465 = vpop.permute.xlu0 %1464
        %1466 = vrot.lane.b32.xlu0 %v1459, 17
        %v1467 = vpop.permute.xlu0 %1466
        %v1468 = vsel %vm470, %v1461, %v1465
        %v1469 = vsel %vm470, %v1463, %v1467
        %v1470 = vsel %vm470, %v1465, %v1461
        %v1471 = vsel %vm470, %v1467, %v1463
        %v1472 = vmul.f32 %v1470, %v479
        %v1473 = vmul.f32 %v1468, %v483
        %v1474 = vmul.f32 %v1471, %v479
        %v1475 = vmul.f32 %v1469, %v483
        %v1476 = vpack.c.bf16 %v1474, %v1472
        %v1477 = vpack.c.bf16 %v1475, %v1473
        %1478 = vst [vmem:[#allocation2 + $0x10] sm:$0xff] %v1476
        %1479 = vst [vmem:[#allocation2 + $0x18] sm:$0xff] %v1477
        %1480 = vrot.lane.b32.xlu0 %v1456, 16
        %v1481 = vpop.permute.xlu0 %1480
        %1482 = vrot.lane.b32.xlu0 %v1458, 16
        %v1483 = vpop.permute.xlu0 %1482
        %1484 = vrot.lane.b32.xlu0 %v1457, 16
        %v1485 = vpop.permute.xlu0 %1484
        %1486 = vrot.lane.b32.xlu0 %v1459, 16
        %v1487 = vpop.permute.xlu0 %1486
        %v1488 = vsel %vm502, %v1481, %v1485
        %v1489 = vsel %vm502, %v1483, %v1487
        %v1490 = vsel %vm502, %v1485, %v1481
        %v1491 = vsel %vm502, %v1487, %v1483
        %v1492 = vmul.f32 %v1490, %v511
        %v1493 = vmul.f32 %v1488, %v515
        %v1494 = vmul.f32 %v1491, %v511
        %v1495 = vmul.f32 %v1489, %v515
        %v1496 = vpack.c.bf16 %v1494, %v1492
        %v1497 = vpack.c.bf16 %v1495, %v1493
        %1498 = vst [vmem:[#allocation2 + $0x30] sm:$0xff] %v1496
        %1499 = vst [vmem:[#allocation2 + $0x38] sm:$0xff] %v1497
        %1500 = vrot.lane.b32.xlu0 %v1456, 15
        %v1501 = vpop.permute.xlu0 %1500
        %1502 = vrot.lane.b32.xlu0 %v1458, 15
        %v1503 = vpop.permute.xlu0 %1502
        %1504 = vrot.lane.b32.xlu0 %v1457, 15
        %v1505 = vpop.permute.xlu0 %1504
        %1506 = vrot.lane.b32.xlu0 %v1459, 15
        %v1507 = vpop.permute.xlu0 %1506
        %v1508 = vsel %vm534, %v1501, %v1505
        %v1509 = vsel %vm534, %v1503, %v1507
        %v1510 = vsel %vm534, %v1505, %v1501
        %v1511 = vsel %vm534, %v1507, %v1503
        %v1512 = vmul.f32 %v1510, %v543
        %v1513 = vmul.f32 %v1508, %v547
        %v1514 = vmul.f32 %v1511, %v543
        %v1515 = vmul.f32 %v1509, %v547
        %v1516 = vpack.c.bf16 %v1514, %v1512
        %v1517 = vpack.c.bf16 %v1515, %v1513
        %1518 = vst [vmem:[#allocation2 + $0x50] sm:$0xff] %v1516
        %1519 = vst [vmem:[#allocation2 + $0x58] sm:$0xff] %v1517
        %1520 = vrot.lane.b32.xlu0 %v1456, 1
        %v1521 = vpop.permute.xlu0 %1520
        %1522 = vrot.lane.b32.xlu0 %v1458, 1
        %v1523 = vpop.permute.xlu0 %1522
        %1524 = vrot.lane.b32.xlu0 %v1457, 1
        %v1525 = vpop.permute.xlu0 %1524
        %1526 = vrot.lane.b32.xlu0 %v1459, 1
        %v1527 = vpop.permute.xlu0 %1526
        %v1528 = vsel %vm566, %v1521, %v1525
        %v1529 = vsel %vm566, %v1523, %v1527
        %v1530 = vsel %vm566, %v1525, %v1521
        %v1531 = vsel %vm566, %v1527, %v1523
        %v1532 = vmul.f32 %v1530, %v575
        %v1533 = vmul.f32 %v1528, %v579
        %v1534 = vmul.f32 %v1531, %v575
        %v1535 = vmul.f32 %v1529, %v579
        %v1536 = vpack.c.bf16 %v1534, %v1532
        %v1537 = vpack.c.bf16 %v1535, %v1533
        %1538 = vst [vmem:[#allocation2 + $0x70] sm:$0xff] %v1536
        %1539 = vst [vmem:[#allocation2 + $0x78] sm:$0xff] %v1537
        %v1540 = vpack.c.bf16 %v1458, %v1456
        %v1541 = vpack.c.bf16 %v1459, %v1457
        %1542 = vst [vmem:[#allocation2 + $0x90] sm:$0xff] %v1540
        %1543 = vst [vmem:[#allocation2 + $0x98] sm:$0xff] %v1541
        %1544 = vrot.lane.b32.xlu0 %v1456, 127
        %v1545 = vpop.permute.xlu0 %1544
        %1546 = vrot.lane.b32.xlu0 %v1458, 127
        %v1547 = vpop.permute.xlu0 %1546
        %1548 = vrot.lane.b32.xlu0 %v1457, 127
        %v1549 = vpop.permute.xlu0 %1548
        %1550 = vrot.lane.b32.xlu0 %v1459, 127
        %v1551 = vpop.permute.xlu0 %1550
        %v1552 = vsel %vm602, %v1545, %v1549
        %v1553 = vsel %vm602, %v1547, %v1551
        %v1554 = vsel %vm602, %v1549, %v1545
        %v1555 = vsel %vm602, %v1551, %v1547
        %v1556 = vmul.f32 %v1552, %v611
        %v1557 = vmul.f32 %v1554, %v615
        %v1558 = vmul.f32 %v1553, %v611
        %v1559 = vmul.f32 %v1555, %v615
        %v1560 = vpack.c.bf16 %v1558, %v1556
        %v1561 = vpack.c.bf16 %v1559, %v1557
        %1562 = vst [vmem:[#allocation2 + $0xb0] sm:$0xff] %v1560
        %1563 = vst [vmem:[#allocation2 + $0xb8] sm:$0xff] %v1561
        %1564 = vrot.lane.b32.xlu0 %v1456, 113
        %v1565 = vpop.permute.xlu0 %1564
        %1566 = vrot.lane.b32.xlu0 %v1458, 113
        %v1567 = vpop.permute.xlu0 %1566
        %1568 = vrot.lane.b32.xlu0 %v1457, 113
        %v1569 = vpop.permute.xlu0 %1568
        %1570 = vrot.lane.b32.xlu0 %v1459, 113
        %v1571 = vpop.permute.xlu0 %1570
        %v1572 = vsel %vm634, %v1565, %v1569
        %v1573 = vsel %vm634, %v1567, %v1571
        %v1574 = vsel %vm634, %v1569, %v1565
        %v1575 = vsel %vm634, %v1571, %v1567
        %v1576 = vmul.f32 %v1572, %v643
        %v1577 = vmul.f32 %v1574, %v647
        %v1578 = vmul.f32 %v1573, %v643
        %v1579 = vmul.f32 %v1575, %v647
        %v1580 = vpack.c.bf16 %v1578, %v1576
        %v1581 = vpack.c.bf16 %v1579, %v1577
        %1582 = vst [vmem:[#allocation2 + $0xd0] sm:$0xff] %v1580
        %1583 = vst [vmem:[#allocation2 + $0xd8] sm:$0xff] %v1581
        %1584 = vrot.lane.b32.xlu0 %v1456, 112
        %v1585 = vpop.permute.xlu0 %1584
        %1586 = vrot.lane.b32.xlu0 %v1458, 112
        %v1587 = vpop.permute.xlu0 %1586
        %1588 = vrot.lane.b32.xlu0 %v1457, 112
        %v1589 = vpop.permute.xlu0 %1588
        %1590 = vrot.lane.b32.xlu0 %v1459, 112
        %v1591 = vpop.permute.xlu0 %1590
        %v1592 = vsel %vm666, %v1585, %v1589
        %v1593 = vsel %vm666, %v1587, %v1591
        %v1594 = vsel %vm666, %v1589, %v1585
        %v1595 = vsel %vm666, %v1591, %v1587
        %v1596 = vmul.f32 %v1592, %v675
        %v1597 = vmul.f32 %v1594, %v679
        %v1598 = vmul.f32 %v1593, %v675
        %v1599 = vmul.f32 %v1595, %v679
        %v1600 = vpack.c.bf16 %v1598, %v1596
        %v1601 = vpack.c.bf16 %v1599, %v1597
        %1602 = vst [vmem:[#allocation2 + $0xf0] sm:$0xff] %v1600
        %1603 = vst [vmem:[#allocation2 + $0xf8] sm:$0xff] %v1601
        %1604 = vrot.lane.b32.xlu0 %v1456, 111
        %v1605 = vpop.permute.xlu0 %1604
        %1606 = vrot.lane.b32.xlu0 %v1458, 111
        %v1607 = vpop.permute.xlu0 %1606
        %1608 = vrot.lane.b32.xlu0 %v1457, 111
        %v1609 = vpop.permute.xlu0 %1608
        %1610 = vrot.lane.b32.xlu0 %v1459, 111
        %v1611 = vpop.permute.xlu0 %1610
        %v1612 = vsel %vm698, %v1605, %v1609
        %v1613 = vsel %vm698, %v1607, %v1611
        %v1614 = vsel %vm698, %v1609, %v1605
        %v1615 = vsel %vm698, %v1611, %v1607
        %v1616 = vmul.f32 %v1612, %v707
        %v1617 = vmul.f32 %v1614, %v711
        %v1618 = vmul.f32 %v1613, %v707
        %v1619 = vmul.f32 %v1615, %v711
        %v1620 = vpack.c.bf16 %v1618, %v1616
        %v1621 = vpack.c.bf16 %v1619, %v1617
        %1622 = vst [vmem:[#allocation2 + $0x110] sm:$0xff] %v1620
        %1623 = vst [vmem:[#allocation2 + $0x118] sm:$0xff] %v1621
        %v1624 = vld [vmem:[%s7] sm:$0xff]
        %v1625 = vld [vmem:[%s7 + $0x8] sm:$0xff]
        %v1626 = vld [vmem:[#allocation2] sm:$0xff]
        %v1627 = vld [vmem:[#allocation2 + $0x8] sm:$0xff]
        %v1628 = vld [vmem:[#allocation2 + $0x10] sm:$0xff]
        %v1629 = vld [vmem:[#allocation2 + $0x18] sm:$0xff]
        %v1630 = vld [vmem:[#allocation2 + $0x20] sm:$0xff]
        %v1631 = vld [vmem:[#allocation2 + $0x28] sm:$0xff]
        %v1632 = vld [vmem:[#allocation2 + $0x30] sm:$0xff]
        %v1633 = vld [vmem:[#allocation2 + $0x38] sm:$0xff]
        %v1634 = vld [vmem:[#allocation2 + $0x40] sm:$0xff]
        %v1635 = vld [vmem:[#allocation2 + $0x48] sm:$0xff]
        %v1636 = vld [vmem:[#allocation2 + $0x50] sm:$0xff]
        %v1637 = vld [vmem:[#allocation2 + $0x58] sm:$0xff]
        %v1638 = vld [vmem:[#allocation2 + $0x60] sm:$0xff]
        %v1639 = vld [vmem:[#allocation2 + $0x68] sm:$0xff]
        %v1640 = vld [vmem:[#allocation2 + $0x70] sm:$0xff]
        %v1641 = vld [vmem:[#allocation2 + $0x78] sm:$0xff]
        %v1642 = vld [vmem:[#allocation2 + $0x80] sm:$0xff]
        %v1643 = vld [vmem:[#allocation2 + $0x88] sm:$0xff]
        %v1644 = vld [vmem:[#allocation2 + $0x90] sm:$0xff]
        %v1645 = vld [vmem:[#allocation2 + $0x98] sm:$0xff]
        %v1646 = vld [vmem:[#allocation2 + $0xa0] sm:$0xff]
        %v1647 = vld [vmem:[#allocation2 + $0xa8] sm:$0xff]
        %v1648 = vld [vmem:[#allocation2 + $0xb0] sm:$0xff]
        %v1649 = vld [vmem:[#allocation2 + $0xb8] sm:$0xff]
        %v1650 = vld [vmem:[#allocation2 + $0xc0] sm:$0xff]
        %v1651 = vld [vmem:[#allocation2 + $0xc8] sm:$0xff]
        %v1652 = vld [vmem:[#allocation2 + $0xd0] sm:$0xff]
        %v1653 = vld [vmem:[#allocation2 + $0xd8] sm:$0xff]
        %v1654 = vld [vmem:[#allocation2 + $0xe0] sm:$0xff]
        %v1655 = vld [vmem:[#allocation2 + $0xe8] sm:$0xff]
        %v1656 = vld [vmem:[#allocation2 + $0xf0] sm:$0xff]
        %v1657 = vld [vmem:[#allocation2 + $0xf8] sm:$0xff]
        %v1658 = vld [vmem:[#allocation2 + $0x100] sm:$0xff]
        %v1659 = vld [vmem:[#allocation2 + $0x108] sm:$0xff]
        %v1660 = vld [vmem:[#allocation2 + $0x110] sm:$0xff]
        %v1661 = vld [vmem:[#allocation2 + $0x118] sm:$0xff]
        %v1664 = vunpack.c.l.b16 %v1624
        %v1665 = vunpack.c.h.b16 %v1624
        %v1666 = vunpack.c.l.b16 %v1625
        %v1667 = vunpack.c.h.b16 %v1625
        %v1668 = vpack.c.b16 %v1666, %v1664
        %v1669 = vpack.c.b16 %v1667, %v1665
        %v1672 = vsel %vm1026, %v1669, 0
        %1674 = vmatprep.subr.bf16.mxu0 %v1627
        %1675 = vmatpush1.bf16.msra.mxu0 %v1626
        %1676 = vmatprep.subr.bf16.mxu0 %v1631
        %1677 = vmatpush1.bf16.msra.mxu0 %v1630
        %1678 = vmatprep.subr.bf16.mxu0 %v1635
        %1679 = vmatpush1.bf16.msra.mxu0 %v1634
        %1680 = vmatprep.subr.bf16.mxu0 %v1639
        %1681 = vmatpush1.bf16.msra.mxu0 %v1638
        %1682 = vmatprep.subr.bf16.mxu0 %v1643
        %1683 = vmatpush1.bf16.msra.mxu0 %v1642
        %1684 = vmatprep.subr.bf16.mxu0 %v1647
        %1685 = vmatpush1.bf16.msra.mxu0 %v1646
        %1686 = vmatprep.subr.bf16.mxu0 %v1651
        %1687 = vmatpush1.bf16.msra.mxu0 %v1650
        %1688 = vmatprep.subr.bf16.mxu0 %v1655
        %1689 = vmatpush1.bf16.msra.mxu0 %v1654
        %1690 = vmatprep.subr.bf16.mxu0 %v1659
        %1691 = vmatpush1.bf16.msra.mxu0 %v1658
        %1692 = vmatprep.subr.bf16.mxu0 0
        %1693 = vmatpush1.bf16.msra.mxu0 0
        %1694 = vmatprep.subr.bf16.mxu0 0
        %1695 = vmatpush1.bf16.msra.mxu0 0
        %1696 = vmatprep.subr.bf16.mxu0 0
        %1697 = vmatpush1.bf16.msra.mxu0 0
        %1698 = vmatprep.subr.bf16.mxu0 0
        %1699 = vmatpush1.bf16.msra.mxu0 0
        %1700 = vmatprep.subr.bf16.mxu0 0
        %1701 = vmatpush1.bf16.msra.mxu0 0
        %1702 = vmatprep.subr.bf16.mxu0 0
        %1703 = vmatpush1.bf16.msra.mxu0 0
        %1704 = vmatprep.subr.bf16.mxu0 0
        %1705 = vmatpush1.bf16.msra.mxu0 0
        %1706 = vmatprep.mubr.bf16.mxu0 %v1672
        %1707 = vmatmul.mubr.bf16.gmra.mrb[0].mxu0 %v1668
        %v1708 = vpop.f32.mrb[0].mxu0
        %v1709 = vadd.f32 0.0, %v1708
        %v1710 = vpop.f32.mrb[0].mxu0
        %v1711 = vadd.f32 0.0, %v1710
        %v1712 = vpop.f32.mrb[0].mxu0
        %v1713 = vadd.f32 0.0, %v1712
        %v1714 = vpop.f32.mrb[0].mxu0
        %v1715 = vadd.f32 0.0, %v1714
        %1716 = vdwg.mxu0
        %1717 = vmatprep.subr.bf16.mxu0 %v1629
        %1718 = vmatpush1.bf16.msra.mxu0 %v1628
        %1719 = vmatprep.subr.bf16.mxu0 %v1633
        %1720 = vmatpush1.bf16.msra.mxu0 %v1632
        %1721 = vmatprep.subr.bf16.mxu0 %v1637
        %1722 = vmatpush1.bf16.msra.mxu0 %v1636
        %1723 = vmatprep.subr.bf16.mxu0 %v1641
        %1724 = vmatpush1.bf16.msra.mxu0 %v1640
        %1725 = vmatprep.subr.bf16.mxu0 %v1645
        %1726 = vmatpush1.bf16.msra.mxu0 %v1644
        %1727 = vmatprep.subr.bf16.mxu0 %v1649
        %1728 = vmatpush1.bf16.msra.mxu0 %v1648
        %1729 = vmatprep.subr.bf16.mxu0 %v1653
        %1730 = vmatpush1.bf16.msra.mxu0 %v1652
        %1731 = vmatprep.subr.bf16.mxu0 %v1657
        %1732 = vmatpush1.bf16.msra.mxu0 %v1656
        %1733 = vmatprep.subr.bf16.mxu0 %v1661
        %1734 = vmatpush1.bf16.msra.mxu0 %v1660
        %1735 = vmatprep.subr.bf16.mxu0 0
        %1736 = vmatpush1.bf16.msra.mxu0 0
        %1737 = vmatprep.subr.bf16.mxu0 0
        %1738 = vmatpush1.bf16.msra.mxu0 0
        %1739 = vmatprep.subr.bf16.mxu0 0
        %1740 = vmatpush1.bf16.msra.mxu0 0
        %1741 = vmatprep.subr.bf16.mxu0 0
        %1742 = vmatpush1.bf16.msra.mxu0 0
        %1743 = vmatprep.subr.bf16.mxu0 0
        %1744 = vmatpush1.bf16.msra.mxu0 0
        %1745 = vmatprep.subr.bf16.mxu0 0
        %1746 = vmatpush1.bf16.msra.mxu0 0
        %1747 = vmatprep.subr.bf16.mxu0 0
        %1748 = vmatpush1.bf16.msra.mxu0 0
        %1749 = vmatprep.mubr.bf16.mxu0 %v1672
        %1750 = vmatmul.mubr.bf16.gmra.mrb[0].mxu0 %v1668
        %v1751 = vpop.f32.mrb[0].mxu0
        %v1752 = vadd.f32 0.0, %v1751
        %v1753 = vpop.f32.mrb[0].mxu0
        %v1754 = vadd.f32 0.0, %v1753
        %v1755 = vpop.f32.mrb[0].mxu0
        %v1756 = vadd.f32 0.0, %v1755
        %v1757 = vpop.f32.mrb[0].mxu0
        %v1758 = vadd.f32 0.0, %v1757
        %1759 = vdwg.mxu0
        %v1760 = vld [vmem:[%s8] sm:$0xf]
        %v1761 = vld [vmem:[%s8 + $0x4] sm:$0xf]
        %v1762 = vld [vmem:[%s317] sm:$0xff]
        %v1763 = vld [vmem:[%s317 + $0x8] sm:$0xff]
        %v1764 = vld [vmem:[%s317 + $0x10] sm:$0xff]
        %v1765 = vld [vmem:[%s317 + $0x18] sm:$0xff]
        %v1766 = vpack.c.bf16 %v1764, %v1762
        %v1767 = vpack.c.bf16 %v1765, %v1763
        %v1770 = vunpack.c.l.b16 %v1760
        %v1771 = vunpack.c.l.b16 %v1761
        %v1772 = vpack.c.b16 %v1771, %v1770
        %v1774 = vsel %vm1026, %v1772, 0
        %1776 = vmatprep.subr.bf16.mxu0 %v1767
        %1777 = vmatpush1.bf16.msra.mxu0 %v1766
        %1778 = vmatprep.subr.bf16.mxu0 0
        %1779 = vmatpush1.bf16.msra.mxu0 0
        %1780 = vmatprep.subr.bf16.mxu0 0
        %1781 = vmatpush1.bf16.msra.mxu0 0
        %1782 = vmatprep.subr.bf16.mxu0 0
        %1783 = vmatpush1.bf16.msra.mxu0 0
        %1784 = vmatprep.subr.bf16.mxu0 0
        %1785 = vmatpush1.bf16.msra.mxu0 0
        %1786 = vmatprep.subr.bf16.mxu0 0
        %1787 = vmatpush1.bf16.msra.mxu0 0
        %1788 = vmatprep.subr.bf16.mxu0 0
        %1789 = vmatpush1.bf16.msra.mxu0 0
        %1790 = vmatprep.subr.bf16.mxu0 0
        %1791 = vmatpush1.bf16.msra.mxu0 0
        %1792 = vmatprep.subr.bf16.mxu0 0
        %1793 = vmatpush1.bf16.msra.mxu0 0
        %1794 = vmatprep.subr.bf16.mxu0 0
        %1795 = vmatpush1.bf16.msra.mxu0 0
        %1796 = vmatprep.subr.bf16.mxu0 0
        %1797 = vmatpush1.bf16.msra.mxu0 0
        %1798 = vmatprep.subr.bf16.mxu0 0
        %1799 = vmatpush1.bf16.msra.mxu0 0
        %1800 = vmatprep.subr.bf16.mxu0 0
        %1801 = vmatpush1.bf16.msra.mxu0 0
        %1802 = vmatprep.subr.bf16.mxu0 0
        %1803 = vmatpush1.bf16.msra.mxu0 0
        %1804 = vmatprep.subr.bf16.mxu0 0
        %1805 = vmatpush1.bf16.msra.mxu0 0
        %1806 = vmatprep.subr.bf16.mxu0 0
        %1807 = vmatpush1.bf16.msra.mxu0 0
        %1808 = vmatprep.mubr.bf16.mxu0 0
        %1809 = vmatmul.mubr.bf16.gmra.mrb[0].mxu0 %v1774
        %v1810 = vpop.f32.mrb[0].mxu0
        %v1811 = vadd.f32 %v1709, %v1810
        %v1812 = vpop.f32.mrb[0].mxu0
        %v1813 = vadd.f32 %v1711, %v1812
        %v1814 = vpop.f32.mrb[0].mxu0
        %v1815 = vadd.f32 %v1713, %v1814
        %v1816 = vpop.f32.mrb[0].mxu0
        %v1817 = vadd.f32 %v1715, %v1816
        %1818 = vdwg.mxu0
        %1819 = vst [vmem:[%s351] sm:$0xff] %v1811
        %1820 = vst [vmem:[%s351 + $0x8] sm:$0xff] %v1813
        %1821 = vst [vmem:[%s351 + $0x10] sm:$0xff] %v1815
        %1822 = vst [vmem:[%s351 + $0x18] sm:$0xff] %v1817
        %v1823 = vld [vmem:[%s8] sm:$0xf]
        %v1824 = vld [vmem:[%s8 + $0x4] sm:$0xf]
        %v1825 = vld [vmem:[%s722] sm:$0xff]
        %v1826 = vld [vmem:[%s722 + $0x8] sm:$0xff]
        %v1827 = vld [vmem:[%s722 + $0x10] sm:$0xff]
        %v1828 = vld [vmem:[%s722 + $0x18] sm:$0xff]
        %v1829 = vpack.c.bf16 %v1827, %v1825
        %v1830 = vpack.c.bf16 %v1828, %v1826
        %v1833 = vunpack.c.l.b16 %v1823
        %v1834 = vunpack.c.l.b16 %v1824
        %v1835 = vpack.c.b16 %v1834, %v1833
        %v1837 = vsel %vm1026, %v1835, 0
        %1839 = vmatprep.subr.bf16.mxu0 %v1830
        %1840 = vmatpush1.bf16.msra.mxu0 %v1829
        %1841 = vmatprep.subr.bf16.mxu0 0
        %1842 = vmatpush1.bf16.msra.mxu0 0
        %1843 = vmatprep.subr.bf16.mxu0 0
        %1844 = vmatpush1.bf16.msra.mxu0 0
        %1845 = vmatprep.subr.bf16.mxu0 0
        %1846 = vmatpush1.bf16.msra.mxu0 0
        %1847 = vmatprep.subr.bf16.mxu0 0
        %1848 = vmatpush1.bf16.msra.mxu0 0
        %1849 = vmatprep.subr.bf16.mxu0 0
        %1850 = vmatpush1.bf16.msra.mxu0 0
        %1851 = vmatprep.subr.bf16.mxu0 0
        %1852 = vmatpush1.bf16.msra.mxu0 0
        %1853 = vmatprep.subr.bf16.mxu0 0
        %1854 = vmatpush1.bf16.msra.mxu0 0
        %1855 = vmatprep.subr.bf16.mxu0 0
        %1856 = vmatpush1.bf16.msra.mxu0 0
        %1857 = vmatprep.subr.bf16.mxu0 0
        %1858 = vmatpush1.bf16.msra.mxu0 0
        %1859 = vmatprep.subr.bf16.mxu0 0
        %1860 = vmatpush1.bf16.msra.mxu0 0
        %1861 = vmatprep.subr.bf16.mxu0 0
        %1862 = vmatpush1.bf16.msra.mxu0 0
        %1863 = vmatprep.subr.bf16.mxu0 0
        %1864 = vmatpush1.bf16.msra.mxu0 0
        %1865 = vmatprep.subr.bf16.mxu0 0
        %1866 = vmatpush1.bf16.msra.mxu0 0
        %1867 = vmatprep.subr.bf16.mxu0 0
        %1868 = vmatpush1.bf16.msra.mxu0 0
        %1869 = vmatprep.subr.bf16.mxu0 0
        %1870 = vmatpush1.bf16.msra.mxu0 0
        %1871 = vmatprep.mubr.bf16.mxu0 0
        %1872 = vmatmul.mubr.bf16.gmra.mrb[0].mxu0 %v1837
        %v1873 = vpop.f32.mrb[0].mxu0
        %v1874 = vadd.f32 %v1752, %v1873
        %v1875 = vpop.f32.mrb[0].mxu0
        %v1876 = vadd.f32 %v1754, %v1875
        %v1877 = vpop.f32.mrb[0].mxu0
        %v1878 = vadd.f32 %v1756, %v1877
        %v1879 = vpop.f32.mrb[0].mxu0
        %v1880 = vadd.f32 %v1758, %v1879
        %1881 = vdwg.mxu0
        %s1882 = scalar_lea.vmem %s351, 32 [#allocation6]
        %1883 = vst [vmem:[%s1882] sm:$0xff] %v1874
        %1884 = vst [vmem:[%s1882 + $0x8] sm:$0xff] %v1876
        %1885 = vst [vmem:[%s1882 + $0x10] sm:$0xff] %v1878
        %1886 = vst [vmem:[%s1882 + $0x18] sm:$0xff] %v1880
        %s1887 = sand.u32 %s228, 1
        %s1888 = scalar_lea.sflag [#allocation5], %s1887
        %s1889 = sand.u32 %s228, 1
        %s1890 = smul.addr %s1889, 64
        %s1891 = scalar_lea.vmem [#allocation6], %s1890
        // Predicated region
        $region61: #{tpu_custom_call.1} parent=55 // pred_check
          %p1892 = pneg %p238
        $region62: #{tpu_custom_call.1} parent=55 // pred_check_branch
          %1894 = sbr.rel (%p1892) target = $region64
        $region63: #{tpu_custom_call.1} parent=55 // pred_region
          %s1895 = smul.u32 2, %s26
          %s1897 = ssub.s32 1024, 1024
          %1898 = vsyncadd %s1888, %s1897
          %s1899 = smul.addr %s1895, 4
          %s1900 = smul.addr %s1899, 128
          %s1901 = scalar_lea.hbm %s9, %s1900
          %s1902 = sshll.u32 %s1891, 4
          %s1903 = int_to_ptr.vmem [resolvable:$true] %s1902
          %1908 = dma.vmem_to_hbm [thread:$0]  %s1903, 1024, %s1901, %s1888, 256, 256, 16
        $region64: #{tpu_custom_call.1} parent=55 // pred_fallthru
          _
      $region56: #{tpu_custom_call.1} parent=5 // pred_fallthru
        _
      %p1909 = scmp.le.s32.totalorder 2, %s21
      // Predicated region
      $region65: #{tpu_custom_call.1} parent=5 // pred_check
        %p1910 = pneg %p1909
      $region66: #{tpu_custom_call.1} parent=5 // pred_check_branch
        %1912 = sbr.rel (%p1910) target = $region68
      $region67: #{tpu_custom_call.1} parent=5 // pred_region
        %s1913 = ssub.s32 %s21, 2
        // Predicated region
        $region69: #{tpu_custom_call.1} parent=67 // pred_check
          %p1914 = pneg %p244
        $region70: #{tpu_custom_call.1} parent=67 // pred_check_branch
          %1916 = sbr.rel (%p1914) target = $region72
        $region71: #{tpu_custom_call.1} parent=67 // pred_region
          %s1917 = sand.u32 %s229, 1
          %s1918 = scalar_lea.sflag [#allocation5], %s1917
          %s1919 = sand.u32 %s229, 1
          %s1920 = smul.addr %s1919, 64
          %s1921 = scalar_lea.vmem [#allocation6], %s1920
          %1922 = dma.done %s1918, 1024
        $region72: #{tpu_custom_call.1} parent=67 // pred_fallthru
          _
      $region68: #{tpu_custom_call.1} parent=5 // pred_fallthru
        _
    $region6: #{tpu_custom_call.1} parent=1 // loop_footer
      %s25 = sadd.s32 1, %s21
    $region7: #{tpu_custom_call.1} parent=1 // loop_footer_branch
      %20 = sbr.rel target = $region3
    $region8: #{tpu_custom_call.1} parent=1 // loop_exit
      _
    %1923 = vsyncpa [#allocation4], 1
    %s1924 = scalar_lea.sflag [#allocation4], 1
    %1925 = vsyncpa %s1924, 1
    %1926 = vsyncpa [#allocation5], 1
    %s1927 = scalar_lea.sflag [#allocation5], 1
    %1928 = vsyncpa %s1927, 1

</llo_original>
